<compile_context>
chip_gen: v5e
topology: v5e:2x2
jax: 0.10.0
libtpu: 0.0.40
codegen_flags: <defaults>
</compile_context>

<pallas_src>
import jax
import jax.numpy as jnp
from jax.experimental import pallas as pl
from jax.experimental.pallas import tpu as pltpu


def _lau_kernel(cur_ref, hist_ref, mask_ref,
                w1c_ref, w1hp_ref, b1_ref,
                w2_ref, b2_ref, w3_ref, b3_ref,
                out_ref):
    cur = cur_ref[...]                        # (TB, H)    bf16
    hist = hist_ref[...]                      # (TB, S, H) bf16
    mask = mask_ref[...]                      # (TB, S)    f32
    TB, S, H = hist.shape
    D1 = w1c_ref.shape[1]
    D2 = w2_ref.shape[1]

    # ---- Layer 1: single K=2H MXU pass over the flat (TB*S, 2H) LHS. ----
    hist_flat = hist.reshape(TB * S, H)                                  # bf16
    prod_flat = (cur[:, None, :] * hist).reshape(TB * S, H)              # bf16
    lhs = jnp.concatenate([hist_flat, prod_flat], axis=-1)               # (TB*S, 2H)

    hp_term = jnp.dot(lhs, w1hp_ref[...],
                      preferred_element_type=jnp.float32)                # (TB*S, D1)

    # S-invariant per-row bias: cur @ w1_cur + b1, hoisted out of S.
    row_bias = jnp.dot(cur, w1c_ref[...],
                       preferred_element_type=jnp.float32) + b1_ref[...]  # (TB, D1)
    row_bias_flat = jnp.broadcast_to(
        row_bias[:, None, :], (TB, S, D1)).reshape(TB * S, D1)

    h1 = jax.nn.sigmoid(hp_term + row_bias_flat)                          # (TB*S, D1) f32

    # ---- Layer 2: bf16 MXU, f32 accumulate, f32 sigmoid. ----
    h2 = jax.nn.sigmoid(
        jnp.dot(h1.astype(jnp.bfloat16), w2_ref[...],
                preferred_element_type=jnp.float32) + b2_ref[...])        # (TB*S, D2)

    # ---- Layer 3 (out_features = 1): VPU multiply + lane reduce. ----
    logits = jnp.sum(h2.reshape(TB, S, D2) * w3_ref[...].reshape(1, 1, D2),
                     axis=-1) + b3_ref[...]                               # (TB, S)

    # ---- Masked softmax over the sequence axis (PyTorch -2**31 sentinel). ----
    neg = jnp.full_like(logits, -(2.0 ** 31))
    masked = jnp.where(mask > 0.5, logits, neg)
    m = jnp.max(masked, axis=-1, keepdims=True)
    e = jnp.exp(masked - m)
    denom = jnp.sum(e, axis=-1, keepdims=True)
    scores = e * pl.reciprocal(denom, approx=True) * mask                 # (TB, S) f32

    # ---- Weighted history sum: VPU multiply + sublane reduce, f32 accum. ----
    out = jnp.sum(scores[:, :, None] * hist.astype(jnp.float32), axis=1)  # (TB, H)
    out_ref[...] = out.astype(out_ref.dtype)


def local_activation_unit(current_item, historical_items, mask, params,
                          *, block_batch=32):
    """current_item (B,H), historical_items (B,S,H), mask (B,S) -> (B,H) f32."""
    B, S, H = historical_items.shape
    w1, b1, w2, b2, w3, b3 = params
    assert w1.shape[0] == 4 * H
    D1 = w1.shape[1]
    D2 = w2.shape[1]

    # Fold the (cur, hist, cur-hist, cur*hist) concat algebraically (in f32,
    # before the bf16 cast):
    #   comb @ W1 == cur@(W1[0:H]+W1[2H:3H]) + hist@(W1[H:2H]-W1[2H:3H])
    #              + (cur*hist)@W1[3H:4H]
    # hist/prod weights are stacked so layer 1 is a single K=2H matmul.
    w1_cur = (w1[0:H] + w1[2 * H:3 * H]).astype(jnp.bfloat16)             # (H, D1)
    w1_hp = jnp.concatenate(
        [w1[H:2 * H] - w1[2 * H:3 * H], w1[3 * H:4 * H]],
        axis=0).astype(jnp.bfloat16)                                      # (2H, D1)
    w2_bf = w2.astype(jnp.bfloat16)
    w3_row = w3.reshape(1, D2).astype(jnp.float32)    # (D2,1) -> (1,D2) VPU reduce
    b3_s = b3.reshape(1, 1)

    # Batch tile: multiple of the f32 sublane pack; pad B up to a multiple of
    # it so the grid always pipelines (padded rows have mask == 0).
    tb = max(8, ((int(block_batch) + 7) // 8) * 8)
    b_pad = ((B + tb - 1) // tb) * tb
    if b_pad != B:
        pad = b_pad - B
        current_item = jnp.pad(current_item, ((0, pad), (0, 0)))
        historical_items = jnp.pad(historical_items, ((0, pad), (0, 0), (0, 0)))
        mask = jnp.pad(mask, ((0, pad), (0, 0)))
    grid = (b_pad // tb,)

    # bf16 activation streams (halves HBM bytes + VMEM footprint); mask f32.
    cur_bf = current_item.astype(jnp.bfloat16)
    hist_bf = historical_items.astype(jnp.bfloat16)
    mask_f = mask.astype(jnp.float32)

    const = lambda i: (0, 0)   # weights stay VMEM-resident across grid steps
    out = pl.pallas_call(
        _lau_kernel,
        grid=grid,
        in_specs=[
            pl.BlockSpec((tb, H), lambda i: (i, 0)),        # current_item (bf16)
            pl.BlockSpec((tb, S, H), lambda i: (i, 0, 0)),  # historical_items (bf16)
            pl.BlockSpec((tb, S), lambda i: (i, 0)),        # mask (f32)
            pl.BlockSpec((H, D1), const),                   # w1_cur
            pl.BlockSpec((2 * H, D1), const),               # w1_hist|w1_prod stacked
            pl.BlockSpec((1, D1), const),                   # b1
            pl.BlockSpec((D1, D2), const),                  # w2
            pl.BlockSpec((1, D2), const),                   # b2
            pl.BlockSpec((1, D2), const),                   # w3 (row)
            pl.BlockSpec((1, 1), const),                    # b3
        ],
        out_specs=pl.BlockSpec((tb, H), lambda i: (i, 0)),
        out_shape=jax.ShapeDtypeStruct((b_pad, H), jnp.float32),
        compiler_params=pltpu.CompilerParams(
            dimension_semantics=("parallel",)),
    )(cur_bf, hist_bf, mask_f,
      w1_cur, w1_hp, b1, w2_bf, b2, w3_row, b3_s)
    return out[:B]


def _init_params(key, embedding_dim, hidden_sizes):
    dims = [8 * embedding_dim] + list(hidden_sizes) + [1]
    params = []
    for i in range(len(dims) - 1):
        fan_in, fan_out = dims[i], dims[i + 1]
        key, kw, kb = jax.random.split(key, 3)
        bound = 1.0 / jnp.sqrt(fan_in)
        w = jax.random.uniform(kw, (fan_in, fan_out), jnp.float32, -bound, bound)
        b = jax.random.uniform(kb, (1, fan_out), jnp.float32, -bound, bound)
        params += [w, b]
    return tuple(params)


def _reference(current_item, historical_items, mask, params):
    """Plain-JAX f32 reference mirroring the PyTorch forward exactly."""
    w1, b1, w2, b2, w3, b3 = params
    B, S, H = historical_items.shape
    cur = jnp.broadcast_to(current_item[:, None, :], (B, S, H))
    comb = jnp.concatenate(
        [cur, historical_items, cur - historical_items, cur * historical_items], axis=-1)
    h = jax.nn.sigmoid(comb @ w1 + b1)
    h = jax.nn.sigmoid(h @ w2 + b2)
    attn = (h @ w3 + b3).squeeze(-1)
    masked = jnp.where(mask == 1.0, attn, jnp.full_like(attn, -(2.0 ** 31)))
    scores = jax.nn.softmax(masked, axis=-1) * mask
    return jnp.einsum('bs,bsh->bh', scores, historical_items)


if __name__ == "__main__":
    embedding_dim = 16
    hidden_sizes = [64, 32]
    B, S = 16, 8
    H = 2 * embedding_dim          # 4*H == 8*embedding_dim == MLP input dim

    key = jax.random.PRNGKey(0)
    kp, kc, kh = jax.random.split(key, 3)
    params = _init_params(kp, embedding_dim, hidden_sizes)

    current_item = jax.random.normal(kc, (B, H), jnp.float32)
    historical_items = jax.random.normal(kh, (B, S, H), jnp.float32)
    # Deterministic 0/1 mask: row b has its first (2 + b % (S-1)) items valid.
    pos = jnp.arange(S)[None, :]
    valid = (jnp.arange(B)[:, None] % (S - 1)) + 2
    mask = (pos < valid).astype(jnp.float32)

    # B=16 < default tile 32, so this also exercises the batch-padding path.
    out = local_activation_unit(current_item, historical_items, mask, params)
    out = jax.block_until_ready(out)

    ref = _reference(current_item, historical_items, mask, params)
    assert out.shape == (B, H)
    # bf16 MXU operands / bf16 hist stream / approx reciprocal -> loosened tol.
    assert jnp.allclose(out, ref, atol=5e-2, rtol=5e-2), (
        "mismatch vs reference, max abs diff = %r" % float(jnp.max(jnp.abs(out - ref))))

    print("KERNEL_OK")
</pallas_src>

<mosaic_0001>
module attributes {stable_mosaic.version = 11 : i64} {
  func.func @_lau_kernel(%arg0: i32, %arg1: memref<32x32xbf16, #tpu.memory_space<vmem>>, %arg2: memref<32x8x32xbf16, #tpu.memory_space<vmem>>, %arg3: memref<32x8xf32, #tpu.memory_space<vmem>>, %arg4: memref<32x64xbf16, #tpu.memory_space<vmem>>, %arg5: memref<64x64xbf16, #tpu.memory_space<vmem>>, %arg6: memref<1x64xf32, #tpu.memory_space<vmem>>, %arg7: memref<64x32xbf16, #tpu.memory_space<vmem>>, %arg8: memref<1x32xf32, #tpu.memory_space<vmem>>, %arg9: memref<1x32xf32, #tpu.memory_space<vmem>>, %arg10: memref<1x1xf32, #tpu.memory_space<vmem>>, %arg11: memref<32x32xf32, #tpu.memory_space<vmem>>) attributes {dimension_semantics = [#tpu.dimension_semantics<parallel>], iteration_bounds = array<i64: 1>, scalar_prefetch = 0 : i64, scratch_operands = 0 : i64, tpu.core_type = #tpu.core_type<tc>, window_params = [{transform_indices = @transform_0, window_bounds = array<i64: 32, 32>}, {transform_indices = @transform_1, window_bounds = array<i64: 32, 8, 32>}, {transform_indices = @transform_2, window_bounds = array<i64: 32, 8>}, {pipeline_mode = #tpu.pipeline_mode<synchronous>, transform_indices = @transform_3, window_bounds = array<i64: 32, 64>}, {pipeline_mode = #tpu.pipeline_mode<synchronous>, transform_indices = @transform_4, window_bounds = array<i64: 64, 64>}, {pipeline_mode = #tpu.pipeline_mode<synchronous>, transform_indices = @transform_5, window_bounds = array<i64: 1, 64>}, {pipeline_mode = #tpu.pipeline_mode<synchronous>, transform_indices = @transform_6, window_bounds = array<i64: 64, 32>}, {pipeline_mode = #tpu.pipeline_mode<synchronous>, transform_indices = @transform_7, window_bounds = array<i64: 1, 32>}, {pipeline_mode = #tpu.pipeline_mode<synchronous>, transform_indices = @transform_8, window_bounds = array<i64: 1, 32>}, {pipeline_mode = #tpu.pipeline_mode<synchronous>, transform_indices = @transform_9, window_bounds = array<i64: 1, 1>}, {transform_indices = @transform_10, window_bounds = array<i64: 32, 32>}]} {
    %c0 = arith.constant 0 : index
    %c0_0 = arith.constant 0 : index
    %0 = vector.load %arg1[%c0, %c0_0] : memref<32x32xbf16, #tpu.memory_space<vmem>>, vector<32x32xbf16>
    %c0_1 = arith.constant 0 : index
    %c0_2 = arith.constant 0 : index
    %c0_3 = arith.constant 0 : index
    %1 = vector.load %arg2[%c0_1, %c0_2, %c0_3] : memref<32x8x32xbf16, #tpu.memory_space<vmem>>, vector<32x8x32xbf16>
    %c0_4 = arith.constant 0 : index
    %c0_5 = arith.constant 0 : index
    %2 = vector.load %arg3[%c0_4, %c0_5] : memref<32x8xf32, #tpu.memory_space<vmem>>, vector<32x8xf32>
    %3 = vector.shape_cast %1 : vector<32x8x32xbf16> to vector<256x32xbf16>
    %4 = vector.shape_cast %0 : vector<32x32xbf16> to vector<32x1x32xbf16>
    %5 = vector.broadcast %4 : vector<32x1x32xbf16> to vector<32x8x32xbf16>
    %6 = arith.mulf %5, %1 : vector<32x8x32xbf16>
    %7 = vector.shape_cast %6 : vector<32x8x32xbf16> to vector<256x32xbf16>
    %8 = tpu.concatenate %3, %7 in 1 : vector<256x32xbf16>, vector<256x32xbf16> -> vector<256x64xbf16>
    %c0_6 = arith.constant 0 : index
    %c0_7 = arith.constant 0 : index
    %9 = vector.load %arg5[%c0_6, %c0_7] : memref<64x64xbf16, #tpu.memory_space<vmem>>, vector<64x64xbf16>
    %cst = arith.constant dense<0.000000e+00> : vector<256x64xf32>
    %10 = tpu.matmul %8, %9, %cst {dimension_numbers = #tpu.dot_dimension_numbers<[1], [0], [0], [1], [0, 0, 1, 1], [], []>} : vector<256x64xbf16>, vector<64x64xbf16>, vector<256x64xf32> -> vector<256x64xf32>
    %c0_8 = arith.constant 0 : index
    %c0_9 = arith.constant 0 : index
    %11 = vector.load %arg4[%c0_8, %c0_9] : memref<32x64xbf16, #tpu.memory_space<vmem>>, vector<32x64xbf16>
    %cst_10 = arith.constant dense<0.000000e+00> : vector<32x64xf32>
    %12 = tpu.matmul %0, %11, %cst_10 {dimension_numbers = #tpu.dot_dimension_numbers<[1], [0], [0], [1], [0, 0, 1, 1], [], []>} : vector<32x32xbf16>, vector<32x64xbf16>, vector<32x64xf32> -> vector<32x64xf32>
    %c0_11 = arith.constant 0 : index
    %c0_12 = arith.constant 0 : index
    %13 = vector.load %arg6[%c0_11, %c0_12] : memref<1x64xf32, #tpu.memory_space<vmem>>, vector<1x64xf32>
    %14 = vector.broadcast %13 : vector<1x64xf32> to vector<32x64xf32>
    %15 = arith.addf %12, %14 : vector<32x64xf32>
    %16 = vector.shape_cast %15 : vector<32x64xf32> to vector<32x1x64xf32>
    %17 = vector.shape_cast %16 : vector<32x1x64xf32> to vector<32x1x64xf32>
    %18 = vector.broadcast %17 : vector<32x1x64xf32> to vector<32x8x64xf32>
    %19 = vector.shape_cast %18 : vector<32x8x64xf32> to vector<256x64xf32>
    %20 = arith.addf %10, %19 : vector<256x64xf32>
    %21 = arith.negf %20 : vector<256x64xf32>
    %22 = math.exp %21 : vector<256x64xf32>
    %cst_13 = arith.constant 1.000000e+00 : f32
    %23 = vector.broadcast %cst_13 : f32 to vector<256x64xf32>
    %24 = arith.addf %23, %22 : vector<256x64xf32>
    %25 = arith.divf %23, %24 : vector<256x64xf32>
    %26 = arith.truncf %25 : vector<256x64xf32> to vector<256x64xbf16>
    %c0_14 = arith.constant 0 : index
    %c0_15 = arith.constant 0 : index
    %27 = vector.load %arg7[%c0_14, %c0_15] : memref<64x32xbf16, #tpu.memory_space<vmem>>, vector<64x32xbf16>
    %cst_16 = arith.constant dense<0.000000e+00> : vector<256x32xf32>
    %28 = tpu.matmul %26, %27, %cst_16 {dimension_numbers = #tpu.dot_dimension_numbers<[1], [0], [0], [1], [0, 0, 1, 1], [], []>} : vector<256x64xbf16>, vector<64x32xbf16>, vector<256x32xf32> -> vector<256x32xf32>
    %c0_17 = arith.constant 0 : index
    %c0_18 = arith.constant 0 : index
    %29 = vector.load %arg8[%c0_17, %c0_18] : memref<1x32xf32, #tpu.memory_space<vmem>>, vector<1x32xf32>
    %30 = vector.broadcast %29 : vector<1x32xf32> to vector<256x32xf32>
    %31 = arith.addf %28, %30 : vector<256x32xf32>
    %32 = arith.negf %31 : vector<256x32xf32>
    %33 = math.exp %32 : vector<256x32xf32>
    %cst_19 = arith.constant 1.000000e+00 : f32
    %34 = vector.broadcast %cst_19 : f32 to vector<256x32xf32>
    %35 = arith.addf %34, %33 : vector<256x32xf32>
    %36 = arith.divf %34, %35 : vector<256x32xf32>
    %37 = vector.shape_cast %36 : vector<256x32xf32> to vector<32x8x32xf32>
    %c0_20 = arith.constant 0 : index
    %c0_21 = arith.constant 0 : index
    %38 = vector.load %arg9[%c0_20, %c0_21] : memref<1x32xf32, #tpu.memory_space<vmem>>, vector<1x32xf32>
    %39 = vector.shape_cast %38 : vector<1x32xf32> to vector<1x1x32xf32>
    %40 = vector.broadcast %39 : vector<1x1x32xf32> to vector<32x8x32xf32>
    %41 = arith.mulf %37, %40 : vector<32x8x32xf32>
    %cst_22 = arith.constant dense<0.000000e+00> : vector<32x8xf32>
    %42 = vector.multi_reduction <add>, %41, %cst_22 [2] : vector<32x8x32xf32> to vector<32x8xf32>
    %c0_23 = arith.constant 0 : index
    %c0_24 = arith.constant 0 : index
    %43 = vector.load %arg10[%c0_23, %c0_24] : memref<1x1xf32, #tpu.memory_space<vmem>>, vector<1x1xf32>
    %44 = vector.broadcast %43 : vector<1x1xf32> to vector<32x8xf32>
    %45 = arith.addf %42, %44 : vector<32x8xf32>
    %cst_25 = arith.constant -2.14748365E+9 : f32
    %46 = vector.broadcast %cst_25 : f32 to vector<32x8xf32>
    %cst_26 = arith.constant 5.000000e-01 : f32
    %47 = vector.broadcast %cst_26 : f32 to vector<32x8xf32>
    %48 = arith.cmpf ogt, %2, %47 : vector<32x8xf32>
    %49 = arith.select %48, %45, %46 : vector<32x8xi1>, vector<32x8xf32>
    %cst_27 = arith.constant dense<0xFF800000> : vector<32xf32>
    %50 = vector.multi_reduction <maximumf>, %49, %cst_27 [1] : vector<32x8xf32> to vector<32xf32>
    %51 = vector.shape_cast %50 : vector<32xf32> to vector<32x1xf32>
    %52 = vector.broadcast %51 : vector<32x1xf32> to vector<32x8xf32>
    %53 = arith.subf %49, %52 : vector<32x8xf32>
    %54 = math.exp %53 : vector<32x8xf32>
    %cst_28 = arith.constant dense<0.000000e+00> : vector<32xf32>
    %55 = vector.multi_reduction <add>, %54, %cst_28 [1] : vector<32x8xf32> to vector<32xf32>
    %56 = vector.shape_cast %55 : vector<32xf32> to vector<32x1xf32>
    %57 = tpu.reciprocal %56 {approx = true} : vector<32x1xf32> -> vector<32x1xf32>
    %58 = vector.broadcast %57 : vector<32x1xf32> to vector<32x8xf32>
    %59 = arith.mulf %54, %58 : vector<32x8xf32>
    %60 = arith.mulf %59, %2 : vector<32x8xf32>
    %61 = vector.shape_cast %60 : vector<32x8xf32> to vector<32x8x1xf32>
    %62 = arith.extf %1 : vector<32x8x32xbf16> to vector<32x8x32xf32>
    %63 = vector.broadcast %61 : vector<32x8x1xf32> to vector<32x8x32xf32>
    %64 = arith.mulf %63, %62 : vector<32x8x32xf32>
    %cst_29 = arith.constant dense<0.000000e+00> : vector<32x32xf32>
    %65 = vector.multi_reduction <add>, %64, %cst_29 [1] : vector<32x8x32xf32> to vector<32x32xf32>
    %c0_30 = arith.constant 0 : index
    %c0_31 = arith.constant 0 : index
    %66 = vector.load %arg11[%c0_30, %c0_31] : memref<32x32xf32, #tpu.memory_space<vmem>>, vector<32x32xf32>
    tpu.vector_store %arg11[%c0_30, %c0_31], %65 {strides = array<i32>} : memref<32x32xf32, #tpu.memory_space<vmem>>, vector<32x32xf32>,
    return
  }
  func.func @transform_0(%arg0: i32) -> (i32, i32) {
    %c0_i32 = arith.constant 0 : i32
    %c0_i32_0 = arith.constant 0 : i32
    return %arg0, %c0_i32 : i32, i32
  }
  func.func @transform_1(%arg0: i32) -> (i32, i32, i32) {
    %c0_i32 = arith.constant 0 : i32
    %c0_i32_0 = arith.constant 0 : i32
    %c0_i32_1 = arith.constant 0 : i32
    return %arg0, %c0_i32, %c0_i32_0 : i32, i32, i32
  }
  func.func @transform_2(%arg0: i32) -> (i32, i32) {
    %c0_i32 = arith.constant 0 : i32
    %c0_i32_0 = arith.constant 0 : i32
    return %arg0, %c0_i32 : i32, i32
  }
  func.func @transform_3(%arg0: i32) -> (i32, i32) {
    %c0_i32 = arith.constant 0 : i32
    %c0_i32_0 = arith.constant 0 : i32
    %c0_i32_1 = arith.constant 0 : i32
    return %c0_i32, %c0_i32_0 : i32, i32
  }
  func.func @transform_4(%arg0: i32) -> (i32, i32) {
    %c0_i32 = arith.constant 0 : i32
    %c0_i32_0 = arith.constant 0 : i32
    %c0_i32_1 = arith.constant 0 : i32
    return %c0_i32, %c0_i32_0 : i32, i32
  }
  func.func @transform_5(%arg0: i32) -> (i32, i32) {
    %c0_i32 = arith.constant 0 : i32
    %c0_i32_0 = arith.constant 0 : i32
    %c0_i32_1 = arith.constant 0 : i32
    return %c0_i32, %c0_i32_0 : i32, i32
  }
  func.func @transform_6(%arg0: i32) -> (i32, i32) {
    %c0_i32 = arith.constant 0 : i32
    %c0_i32_0 = arith.constant 0 : i32
    %c0_i32_1 = arith.constant 0 : i32
    return %c0_i32, %c0_i32_0 : i32, i32
  }
  func.func @transform_7(%arg0: i32) -> (i32, i32) {
    %c0_i32 = arith.constant 0 : i32
    %c0_i32_0 = arith.constant 0 : i32
    %c0_i32_1 = arith.constant 0 : i32
    return %c0_i32, %c0_i32_0 : i32, i32
  }
  func.func @transform_8(%arg0: i32) -> (i32, i32) {
    %c0_i32 = arith.constant 0 : i32
    %c0_i32_0 = arith.constant 0 : i32
    %c0_i32_1 = arith.constant 0 : i32
    return %c0_i32, %c0_i32_0 : i32, i32
  }
  func.func @transform_9(%arg0: i32) -> (i32, i32) {
    %c0_i32 = arith.constant 0 : i32
    %c0_i32_0 = arith.constant 0 : i32
    %c0_i32_1 = arith.constant 0 : i32
    return %c0_i32, %c0_i32_0 : i32, i32
  }
  func.func @transform_10(%arg0: i32) -> (i32, i32) {
    %c0_i32 = arith.constant 0 : i32
    %c0_i32_0 = arith.constant 0 : i32
    return %arg0, %c0_i32 : i32, i32
  }
}

</mosaic_0001>

<llo_original>
// kernel: tpu_custom_call.1
$region0: #{tpu_custom_call.1}
  #allocation0 [shape = 'u32[]', space=smem, size = 0x4, offset = 0x4, fixed_abs, tag = 'smem constant byte address 0x4 - core index']
  #allocation1 [shape = 'u32[72,128]{1,0:T(1,128)}', space=vmem, size = 0x9000, scoped, tag = 'internal scratch']
  #allocation2 [shape = 'f32[1,1]{1,0:T(1,128)S(1)}', space=vmem, size = 0x200, scoped, tag = 'scoped memory for tpu_custom_call.1']
  %s0 = inlined_call_operand.vmem [shape: bf16[32,32], index: 0, kind: input, shape index: {}]
  %s1 = inlined_call_operand.hbm [shape: bf16[32,8,32], index: 1, kind: input, shape index: {}]
  %s2 = inlined_call_operand.vmem [shape: f32[32,8], index: 2, kind: input, shape index: {}]
  %s3 = inlined_call_operand.vmem [shape: bf16[32,64], index: 3, kind: input, shape index: {}]
  %s4 = inlined_call_operand.vmem [shape: bf16[64,64], index: 4, kind: input, shape index: {}]
  %s5 = inlined_call_operand.vmem [shape: f32[1,64], index: 5, kind: input, shape index: {}]
  %s6 = inlined_call_operand.vmem [shape: bf16[64,32], index: 6, kind: input, shape index: {}]
  %s7 = inlined_call_operand.vmem [shape: f32[1,32], index: 7, kind: input, shape index: {}]
  %s8 = inlined_call_operand.vmem [shape: f32[1,32], index: 8, kind: input, shape index: {}]
  %s9 = inlined_call_operand.<no memory space> [shape: f32[1,1], index: 9, kind: input, shape index: {}]
  %s10 = inlined_call_operand.hbm [shape: f32[32,32], index: 10, kind: output, shape index: {}]
  %s11 = sld [smem:[#allocation0]]
  $region54: #{tpu_custom_call.1} parent=0
    _
  %s13 = ssub.s32 1, %s11
  %s14 = scalar_select 0, %s13, %s11
  %v15 = vstv %s9
  %16 = vst [vmem:[#allocation2] sm:$0x1] %v15
  $region1: #{tpu_custom_call.1} parent=0
    #allocation3 [shape = 'u8[65536]{0}', space=vmem, size = 0x10000, scoped, tag = 'input window, operand 1, single buffered']
    #allocation4 [shape = 's32[1]{0}', space=sflag, size = 0x4, scoped, tag = 'scoped memory for tpu_custom_call.1']
    #allocation5 [shape = 's32[1]{0}', space=sflag, size = 0x4, scoped, tag = 'scoped memory for tpu_custom_call.1']
    #allocation6 [shape = 'u8[16384]{0}', space=vmem, size = 0x4000, scoped, tag = 'output window, operand 0, single buffered']
    %17 = vsyncpa [#allocation4], 0
    %18 = vsyncpa [#allocation5], 0
    // Predicated region
    $region2: #{tpu_custom_call.1} parent=1 // pred_check
      _
    $region3: #{tpu_custom_call.1} parent=1 // pred_check_branch
      %20 = sbr.rel (0) target = $region5
    $region4: #{tpu_custom_call.1} parent=1 // pred_region
      _
    $region5: #{tpu_custom_call.1} parent=1 // pred_fallthru
      _
    // Predicated region
    $region6: #{tpu_custom_call.1} parent=1 // pred_check
      _
    $region7: #{tpu_custom_call.1} parent=1 // pred_check_branch
      %22 = sbr.rel (0) target = $region9
    $region8: #{tpu_custom_call.1} parent=1 // pred_region
      %24 = vsyncadd [#allocation4], 0
      %s25 = sshll.u32 %s1, 4
      %s26 = int_to_ptr.hbm [resolvable:$true] %s25
      %s27 = sshll.u32 [#allocation3], 4
      %s28 = int_to_ptr.vmem [resolvable:$true] %s27
      %33 = dma.hbm_to_vmem [thread:$0]  %s26, 2048, %s28, [#allocation4], 64, 64, 4
    $region9: #{tpu_custom_call.1} parent=1 // pred_fallthru
      _
    // Predicated region
    $region10: #{tpu_custom_call.1} parent=1 // pred_check
      _
    $region11: #{tpu_custom_call.1} parent=1 // pred_check_branch
      %35 = sbr.rel (0) target = $region13
    $region12: #{tpu_custom_call.1} parent=1 // pred_region
      _
    $region13: #{tpu_custom_call.1} parent=1 // pred_fallthru
      _
    // Predicated region
    $region14: #{tpu_custom_call.1} parent=1 // pred_check
      _
    $region15: #{tpu_custom_call.1} parent=1 // pred_check_branch
      %37 = sbr.rel (0) target = $region17
    $region16: #{tpu_custom_call.1} parent=1 // pred_region
      _
    $region17: #{tpu_custom_call.1} parent=1 // pred_fallthru
      _
    // Predicated region
    $region18: #{tpu_custom_call.1} parent=1 // pred_check
      _
    $region19: #{tpu_custom_call.1} parent=1 // pred_check_branch
      %39 = sbr.rel (0) target = $region21
    $region20: #{tpu_custom_call.1} parent=1 // pred_region
      _
    $region21: #{tpu_custom_call.1} parent=1 // pred_fallthru
      _
    // Predicated region
    $region22: #{tpu_custom_call.1} parent=1 // pred_check
      _
    $region23: #{tpu_custom_call.1} parent=1 // pred_check_branch
      %41 = sbr.rel (0) target = $region25
    $region24: #{tpu_custom_call.1} parent=1 // pred_region
      _
    $region25: #{tpu_custom_call.1} parent=1 // pred_fallthru
      _
    // Predicated region
    $region26: #{tpu_custom_call.1} parent=1 // pred_check
      _
    $region27: #{tpu_custom_call.1} parent=1 // pred_check_branch
      %43 = sbr.rel (0) target = $region29
    $region28: #{tpu_custom_call.1} parent=1 // pred_region
      _
    $region29: #{tpu_custom_call.1} parent=1 // pred_fallthru
      _
    // Predicated region
    $region30: #{tpu_custom_call.1} parent=1 // pred_check
      _
    $region31: #{tpu_custom_call.1} parent=1 // pred_check_branch
      %45 = sbr.rel (0) target = $region33
    $region32: #{tpu_custom_call.1} parent=1 // pred_region
      _
    $region33: #{tpu_custom_call.1} parent=1 // pred_fallthru
      _
    // Predicated region
    $region34: #{tpu_custom_call.1} parent=1 // pred_check
      _
    $region35: #{tpu_custom_call.1} parent=1 // pred_check_branch
      %47 = sbr.rel (0) target = $region37
    $region36: #{tpu_custom_call.1} parent=1 // pred_region
      _
    $region37: #{tpu_custom_call.1} parent=1 // pred_fallthru
      _
    // Predicated region
    $region38: #{tpu_custom_call.1} parent=1 // pred_check
      _
    $region39: #{tpu_custom_call.1} parent=1 // pred_check_branch
      %49 = sbr.rel (0) target = $region41
    $region40: #{tpu_custom_call.1} parent=1 // pred_region
      _
    $region41: #{tpu_custom_call.1} parent=1 // pred_fallthru
      _
    // Predicated region
    $region42: #{tpu_custom_call.1} parent=1 // pred_check
      _
    $region43: #{tpu_custom_call.1} parent=1 // pred_check_branch
      %51 = sbr.rel (0) target = $region45
    $region44: #{tpu_custom_call.1} parent=1 // pred_region
      %53 = dma.done [#allocation4], 2048
    $region45: #{tpu_custom_call.1} parent=1 // pred_fallthru
      _
    %v55 = vld [vmem:[%s0] sm:$0xf]
    %v56 = vld [vmem:[%s0 + $0x4] sm:$0xf]
    %v57 = vld [vmem:[%s0 + $0x8] sm:$0xf]
    %v58 = vld [vmem:[%s0 + $0xc] sm:$0xf]
    %v59 = vld [vmem:[#allocation3] sm:$0xf]
    %v60 = vld [vmem:[#allocation3 + $0x4] sm:$0xf]
    %v61 = vld [vmem:[#allocation3 + $0x8] sm:$0xf]
    %v62 = vld [vmem:[#allocation3 + $0xc] sm:$0xf]
    %v63 = vld [vmem:[#allocation3 + $0x10] sm:$0xf]
    %v64 = vld [vmem:[#allocation3 + $0x14] sm:$0xf]
    %v65 = vld [vmem:[#allocation3 + $0x18] sm:$0xf]
    %v66 = vld [vmem:[#allocation3 + $0x1c] sm:$0xf]
    %v67 = vld [vmem:[#allocation3 + $0x20] sm:$0xf]
    %v68 = vld [vmem:[#allocation3 + $0x24] sm:$0xf]
    %v69 = vld [vmem:[#allocation3 + $0x28] sm:$0xf]
    %v70 = vld [vmem:[#allocation3 + $0x2c] sm:$0xf]
    %v71 = vld [vmem:[#allocation3 + $0x30] sm:$0xf]
    %v72 = vld [vmem:[#allocation3 + $0x34] sm:$0xf]
    %v73 = vld [vmem:[#allocation3 + $0x38] sm:$0xf]
    %v74 = vld [vmem:[#allocation3 + $0x3c] sm:$0xf]
    %v75 = vld [vmem:[#allocation3 + $0x40] sm:$0xf]
    %v76 = vld [vmem:[#allocation3 + $0x44] sm:$0xf]
    %v77 = vld [vmem:[#allocation3 + $0x48] sm:$0xf]
    %v78 = vld [vmem:[#allocation3 + $0x4c] sm:$0xf]
    %v79 = vld [vmem:[#allocation3 + $0x50] sm:$0xf]
    %v80 = vld [vmem:[#allocation3 + $0x54] sm:$0xf]
    %v81 = vld [vmem:[#allocation3 + $0x58] sm:$0xf]
    %v82 = vld [vmem:[#allocation3 + $0x5c] sm:$0xf]
    %v83 = vld [vmem:[#allocation3 + $0x60] sm:$0xf]
    %v84 = vld [vmem:[#allocation3 + $0x64] sm:$0xf]
    %v85 = vld [vmem:[#allocation3 + $0x68] sm:$0xf]
    %v86 = vld [vmem:[#allocation3 + $0x6c] sm:$0xf]
    %v87 = vld [vmem:[#allocation3 + $0x70] sm:$0xf]
    %v88 = vld [vmem:[#allocation3 + $0x74] sm:$0xf]
    %v89 = vld [vmem:[#allocation3 + $0x78] sm:$0xf]
    %v90 = vld [vmem:[#allocation3 + $0x7c] sm:$0xf]
    %v91 = vld [vmem:[%s2] sm:$0xff]
    %v92 = vld [vmem:[%s2 + $0x8] sm:$0xff]
    %v93 = vld [vmem:[%s2 + $0x10] sm:$0xff]
    %v94 = vld [vmem:[%s2 + $0x18] sm:$0xff]
    %v99 = vrot.slane %v55, 3
    %v100 = vrot.slane %v56, 3
    %v101 = vrot.slane %v57, 3
    %v102 = vrot.slane %v58, 3
    %vm103 = vcmask 1040384
    %v106 = vsel %vm103, %v55, %v99
    %vm108 = vcmask 1041409
    %v109 = vsel %vm108, %v55, %v99
    %v111 = vrot.slane %v109, 1
    %vm112 = vcmask 1042434
    %v113 = vsel %vm112, %v55, %v99
    %v115 = vrot.slane %v113, 2
    %vm116 = vcmask 1043459
    %v117 = vsel %vm116, %v55, %v99
    %v119 = vrot.slane %v117, 3
    %v122 = vsel %vm103, %v56, %v100
    %v124 = vsel %vm108, %v56, %v100
    %v126 = vrot.slane %v124, 1
    %v127 = vsel %vm112, %v56, %v100
    %v129 = vrot.slane %v127, 2
    %v130 = vsel %vm116, %v56, %v100
    %v132 = vrot.slane %v130, 3
    %v135 = vsel %vm103, %v57, %v101
    %v137 = vsel %vm108, %v57, %v101
    %v139 = vrot.slane %v137, 1
    %v140 = vsel %vm112, %v57, %v101
    %v142 = vrot.slane %v140, 2
    %v143 = vsel %vm116, %v57, %v101
    %v145 = vrot.slane %v143, 3
    %v148 = vsel %vm103, %v58, %v102
    %v150 = vsel %vm108, %v58, %v102
    %v152 = vrot.slane %v150, 1
    %v153 = vsel %vm112, %v58, %v102
    %v155 = vrot.slane %v153, 2
    %v156 = vsel %vm116, %v58, %v102
    %v158 = vrot.slane %v156, 3
    %v159 = vunpack.i.l.s16 %v106
    %v160 = vunpack.i.h.s16 %v106
    %v161 = vunpack.i.l.s16 %v111
    %v162 = vunpack.i.h.s16 %v111
    %v163 = vunpack.i.l.s16 %v115
    %v164 = vunpack.i.h.s16 %v115
    %v165 = vunpack.i.l.s16 %v119
    %v166 = vunpack.i.h.s16 %v119
    %v167 = vunpack.i.l.s16 %v122
    %v168 = vunpack.i.h.s16 %v122
    %v169 = vunpack.i.l.s16 %v126
    %v170 = vunpack.i.h.s16 %v126
    %v171 = vunpack.i.l.s16 %v129
    %v172 = vunpack.i.h.s16 %v129
    %v173 = vunpack.i.l.s16 %v132
    %v174 = vunpack.i.h.s16 %v132
    %v175 = vunpack.i.l.s16 %v135
    %v176 = vunpack.i.h.s16 %v135
    %v177 = vunpack.i.l.s16 %v139
    %v178 = vunpack.i.h.s16 %v139
    %v179 = vunpack.i.l.s16 %v142
    %v180 = vunpack.i.h.s16 %v142
    %v181 = vunpack.i.l.s16 %v145
    %v182 = vunpack.i.h.s16 %v145
    %v183 = vunpack.i.l.s16 %v148
    %v184 = vunpack.i.h.s16 %v148
    %v185 = vunpack.i.l.s16 %v152
    %v186 = vunpack.i.h.s16 %v152
    %v187 = vunpack.i.l.s16 %v155
    %v188 = vunpack.i.h.s16 %v155
    %v189 = vunpack.i.l.s16 %v158
    %v190 = vunpack.i.h.s16 %v158
    %v191 = vpack.i.b16 %v159, %v159
    %v192 = vpack.i.b16 %v160, %v160
    %v193 = vpack.i.b16 %v161, %v161
    %v194 = vpack.i.b16 %v162, %v162
    %v195 = vpack.i.b16 %v163, %v163
    %v196 = vpack.i.b16 %v164, %v164
    %v197 = vpack.i.b16 %v165, %v165
    %v198 = vpack.i.b16 %v166, %v166
    %v199 = vpack.i.b16 %v167, %v167
    %v200 = vpack.i.b16 %v168, %v168
    %v201 = vpack.i.b16 %v169, %v169
    %v202 = vpack.i.b16 %v170, %v170
    %v203 = vpack.i.b16 %v171, %v171
    %v204 = vpack.i.b16 %v172, %v172
    %v205 = vpack.i.b16 %v173, %v173
    %v206 = vpack.i.b16 %v174, %v174
    %v207 = vpack.i.b16 %v175, %v175
    %v208 = vpack.i.b16 %v176, %v176
    %v209 = vpack.i.b16 %v177, %v177
    %v210 = vpack.i.b16 %v178, %v178
    %v211 = vpack.i.b16 %v179, %v179
    %v212 = vpack.i.b16 %v180, %v180
    %v213 = vpack.i.b16 %v181, %v181
    %v214 = vpack.i.b16 %v182, %v182
    %v215 = vpack.i.b16 %v183, %v183
    %v216 = vpack.i.b16 %v184, %v184
    %v217 = vpack.i.b16 %v185, %v185
    %v218 = vpack.i.b16 %v186, %v186
    %v219 = vpack.i.b16 %v187, %v187
    %v220 = vpack.i.b16 %v188, %v188
    %v221 = vpack.i.b16 %v189, %v189
    %v222 = vpack.i.b16 %v190, %v190
    %v223 = vperm.slane %v191, 0
    %v224 = vperm.slane %v192, 0
    %v225 = vperm.slane %v193, 0
    %v226 = vperm.slane %v194, 0
    %v227 = vperm.slane %v195, 0
    %v228 = vperm.slane %v196, 0
    %v229 = vperm.slane %v197, 0
    %v230 = vperm.slane %v198, 0
    %v231 = vperm.slane %v199, 0
    %v232 = vperm.slane %v200, 0
    %v233 = vperm.slane %v201, 0
    %v234 = vperm.slane %v202, 0
    %v235 = vperm.slane %v203, 0
    %v236 = vperm.slane %v204, 0
    %v237 = vperm.slane %v205, 0
    %v238 = vperm.slane %v206, 0
    %v239 = vperm.slane %v207, 0
    %v240 = vperm.slane %v208, 0
    %v241 = vperm.slane %v209, 0
    %v242 = vperm.slane %v210, 0
    %v243 = vperm.slane %v211, 0
    %v244 = vperm.slane %v212, 0
    %v245 = vperm.slane %v213, 0
    %v246 = vperm.slane %v214, 0
    %v247 = vperm.slane %v215, 0
    %v248 = vperm.slane %v216, 0
    %v249 = vperm.slane %v217, 0
    %v250 = vperm.slane %v218, 0
    %v251 = vperm.slane %v219, 0
    %v252 = vperm.slane %v220, 0
    %v253 = vperm.slane %v221, 0
    %v254 = vperm.slane %v222, 0
    %v256 = vpack.i.b16 %v223, %v223
    %v258 = vperm.slane %v256, 0
    %v260 = vpack.i.b16 %v224, %v224
    %v262 = vperm.slane %v260, 0
    %v264 = vpack.i.b16 %v225, %v225
    %v266 = vperm.slane %v264, 0
    %v268 = vpack.i.b16 %v226, %v226
    %v270 = vperm.slane %v268, 0
    %v272 = vpack.i.b16 %v227, %v227
    %v274 = vperm.slane %v272, 0
    %v276 = vpack.i.b16 %v228, %v228
    %v278 = vperm.slane %v276, 0
    %v280 = vpack.i.b16 %v229, %v229
    %v282 = vperm.slane %v280, 0
    %v284 = vpack.i.b16 %v230, %v230
    %v286 = vperm.slane %v284, 0
    %v288 = vpack.i.b16 %v231, %v231
    %v290 = vperm.slane %v288, 0
    %v292 = vpack.i.b16 %v232, %v232
    %v294 = vperm.slane %v292, 0
    %v296 = vpack.i.b16 %v233, %v233
    %v298 = vperm.slane %v296, 0
    %v300 = vpack.i.b16 %v234, %v234
    %v302 = vperm.slane %v300, 0
    %v304 = vpack.i.b16 %v235, %v235
    %v306 = vperm.slane %v304, 0
    %v308 = vpack.i.b16 %v236, %v236
    %v310 = vperm.slane %v308, 0
    %v312 = vpack.i.b16 %v237, %v237
    %v314 = vperm.slane %v312, 0
    %v316 = vpack.i.b16 %v238, %v238
    %v318 = vperm.slane %v316, 0
    %v320 = vpack.i.b16 %v239, %v239
    %v322 = vperm.slane %v320, 0
    %v324 = vpack.i.b16 %v240, %v240
    %v326 = vperm.slane %v324, 0
    %v328 = vpack.i.b16 %v241, %v241
    %v330 = vperm.slane %v328, 0
    %v332 = vpack.i.b16 %v242, %v242
    %v334 = vperm.slane %v332, 0
    %v336 = vpack.i.b16 %v243, %v243
    %v338 = vperm.slane %v336, 0
    %v340 = vpack.i.b16 %v244, %v244
    %v342 = vperm.slane %v340, 0
    %v344 = vpack.i.b16 %v245, %v245
    %v346 = vperm.slane %v344, 0
    %v348 = vpack.i.b16 %v246, %v246
    %v350 = vperm.slane %v348, 0
    %v352 = vpack.i.b16 %v247, %v247
    %v354 = vperm.slane %v352, 0
    %v356 = vpack.i.b16 %v248, %v248
    %v358 = vperm.slane %v356, 0
    %v360 = vpack.i.b16 %v249, %v249
    %v362 = vperm.slane %v360, 0
    %v364 = vpack.i.b16 %v250, %v250
    %v366 = vperm.slane %v364, 0
    %v368 = vpack.i.b16 %v251, %v251
    %v370 = vperm.slane %v368, 0
    %v372 = vpack.i.b16 %v252, %v252
    %v374 = vperm.slane %v372, 0
    %v376 = vpack.i.b16 %v253, %v253
    %v378 = vperm.slane %v376, 0
    %v380 = vpack.i.b16 %v254, %v254
    %v382 = vperm.slane %v380, 0
    %v383 = vunpack.c.l.bf16 %v258
    %v384 = vunpack.c.l.bf16 %v262
    %v385 = vunpack.c.l.bf16 %v266
    %v386 = vunpack.c.l.bf16 %v270
    %v387 = vunpack.c.l.bf16 %v274
    %v388 = vunpack.c.l.bf16 %v278
    %v389 = vunpack.c.l.bf16 %v282
    %v390 = vunpack.c.l.bf16 %v286
    %v391 = vunpack.c.l.bf16 %v290
    %v392 = vunpack.c.l.bf16 %v294
    %v393 = vunpack.c.l.bf16 %v298
    %v394 = vunpack.c.l.bf16 %v302
    %v395 = vunpack.c.l.bf16 %v306
    %v396 = vunpack.c.l.bf16 %v310
    %v397 = vunpack.c.l.bf16 %v314
    %v398 = vunpack.c.l.bf16 %v318
    %v399 = vunpack.c.l.bf16 %v322
    %v400 = vunpack.c.l.bf16 %v326
    %v401 = vunpack.c.l.bf16 %v330
    %v402 = vunpack.c.l.bf16 %v334
    %v403 = vunpack.c.l.bf16 %v338
    %v404 = vunpack.c.l.bf16 %v342
    %v405 = vunpack.c.l.bf16 %v346
    %v406 = vunpack.c.l.bf16 %v350
    %v407 = vunpack.c.l.bf16 %v354
    %v408 = vunpack.c.l.bf16 %v358
    %v409 = vunpack.c.l.bf16 %v362
    %v410 = vunpack.c.l.bf16 %v366
    %v411 = vunpack.c.l.bf16 %v370
    %v412 = vunpack.c.l.bf16 %v374
    %v413 = vunpack.c.l.bf16 %v378
    %v414 = vunpack.c.l.bf16 %v382
    %v415 = vunpack.c.l.bf16 %v59
    %v416 = vunpack.c.l.bf16 %v60
    %v417 = vunpack.c.l.bf16 %v61
    %v418 = vunpack.c.l.bf16 %v62
    %v419 = vunpack.c.l.bf16 %v63
    %v420 = vunpack.c.l.bf16 %v64
    %v421 = vunpack.c.l.bf16 %v65
    %v422 = vunpack.c.l.bf16 %v66
    %v423 = vunpack.c.l.bf16 %v67
    %v424 = vunpack.c.l.bf16 %v68
    %v425 = vunpack.c.l.bf16 %v69
    %v426 = vunpack.c.l.bf16 %v70
    %v427 = vunpack.c.l.bf16 %v71
    %v428 = vunpack.c.l.bf16 %v72
    %v429 = vunpack.c.l.bf16 %v73
    %v430 = vunpack.c.l.bf16 %v74
    %v431 = vunpack.c.l.bf16 %v75
    %v432 = vunpack.c.l.bf16 %v76
    %v433 = vunpack.c.l.bf16 %v77
    %v434 = vunpack.c.l.bf16 %v78
    %v435 = vunpack.c.l.bf16 %v79
    %v436 = vunpack.c.l.bf16 %v80
    %v437 = vunpack.c.l.bf16 %v81
    %v438 = vunpack.c.l.bf16 %v82
    %v439 = vunpack.c.l.bf16 %v83
    %v440 = vunpack.c.l.bf16 %v84
    %v441 = vunpack.c.l.bf16 %v85
    %v442 = vunpack.c.l.bf16 %v86
    %v443 = vunpack.c.l.bf16 %v87
    %v444 = vunpack.c.l.bf16 %v88
    %v445 = vunpack.c.l.bf16 %v89
    %v446 = vunpack.c.l.bf16 %v90
    %v447 = vmul.f32 %v383, %v415
    %v448 = vmul.f32 %v384, %v416
    %v449 = vmul.f32 %v385, %v417
    %v450 = vmul.f32 %v386, %v418
    %v451 = vmul.f32 %v387, %v419
    %v452 = vmul.f32 %v388, %v420
    %v453 = vmul.f32 %v389, %v421
    %v454 = vmul.f32 %v390, %v422
    %v455 = vmul.f32 %v391, %v423
    %v456 = vmul.f32 %v392, %v424
    %v457 = vmul.f32 %v393, %v425
    %v458 = vmul.f32 %v394, %v426
    %v459 = vmul.f32 %v395, %v427
    %v460 = vmul.f32 %v396, %v428
    %v461 = vmul.f32 %v397, %v429
    %v462 = vmul.f32 %v398, %v430
    %v463 = vmul.f32 %v399, %v431
    %v464 = vmul.f32 %v400, %v432
    %v465 = vmul.f32 %v401, %v433
    %v466 = vmul.f32 %v402, %v434
    %v467 = vmul.f32 %v403, %v435
    %v468 = vmul.f32 %v404, %v436
    %v469 = vmul.f32 %v405, %v437
    %v470 = vmul.f32 %v406, %v438
    %v471 = vmul.f32 %v407, %v439
    %v472 = vmul.f32 %v408, %v440
    %v473 = vmul.f32 %v409, %v441
    %v474 = vmul.f32 %v410, %v442
    %v475 = vmul.f32 %v411, %v443
    %v476 = vmul.f32 %v412, %v444
    %v477 = vmul.f32 %v413, %v445
    %v478 = vmul.f32 %v414, %v446
    %v479 = vpack.c.bf16 %v447, %v447
    %v480 = vpack.c.bf16 %v448, %v448
    %v481 = vpack.c.bf16 %v449, %v449
    %v482 = vpack.c.bf16 %v450, %v450
    %v483 = vpack.c.bf16 %v451, %v451
    %v484 = vpack.c.bf16 %v452, %v452
    %v485 = vpack.c.bf16 %v453, %v453
    %v486 = vpack.c.bf16 %v454, %v454
    %v487 = vpack.c.bf16 %v455, %v455
    %v488 = vpack.c.bf16 %v456, %v456
    %v489 = vpack.c.bf16 %v457, %v457
    %v490 = vpack.c.bf16 %v458, %v458
    %v491 = vpack.c.bf16 %v459, %v459
    %v492 = vpack.c.bf16 %v460, %v460
    %v493 = vpack.c.bf16 %v461, %v461
    %v494 = vpack.c.bf16 %v462, %v462
    %v495 = vpack.c.bf16 %v463, %v463
    %v496 = vpack.c.bf16 %v464, %v464
    %v497 = vpack.c.bf16 %v465, %v465
    %v498 = vpack.c.bf16 %v466, %v466
    %v499 = vpack.c.bf16 %v467, %v467
    %v500 = vpack.c.bf16 %v468, %v468
    %v501 = vpack.c.bf16 %v469, %v469
    %v502 = vpack.c.bf16 %v470, %v470
    %v503 = vpack.c.bf16 %v471, %v471
    %v504 = vpack.c.bf16 %v472, %v472
    %v505 = vpack.c.bf16 %v473, %v473
    %v506 = vpack.c.bf16 %v474, %v474
    %v507 = vpack.c.bf16 %v475, %v475
    %v508 = vpack.c.bf16 %v476, %v476
    %v509 = vpack.c.bf16 %v477, %v477
    %v510 = vpack.c.bf16 %v478, %v478
    %v543 = vunpack.c.l.b16 %v59
    %v544 = vunpack.c.l.b16 %v60
    %v545 = vunpack.c.l.b16 %v61
    %v546 = vunpack.c.l.b16 %v62
    %v547 = vunpack.c.l.b16 %v63
    %v548 = vunpack.c.l.b16 %v64
    %v549 = vunpack.c.l.b16 %v65
    %v550 = vunpack.c.l.b16 %v66
    %v551 = vunpack.c.l.b16 %v67
    %v552 = vunpack.c.l.b16 %v68
    %v553 = vunpack.c.l.b16 %v69
    %v554 = vunpack.c.l.b16 %v70
    %v555 = vunpack.c.l.b16 %v71
    %v556 = vunpack.c.l.b16 %v72
    %v557 = vunpack.c.l.b16 %v73
    %v558 = vunpack.c.l.b16 %v74
    %v559 = vunpack.c.l.b16 %v75
    %v560 = vunpack.c.l.b16 %v76
    %v561 = vunpack.c.l.b16 %v77
    %v562 = vunpack.c.l.b16 %v78
    %v563 = vunpack.c.l.b16 %v79
    %v564 = vunpack.c.l.b16 %v80
    %v565 = vunpack.c.l.b16 %v81
    %v566 = vunpack.c.l.b16 %v82
    %v567 = vunpack.c.l.b16 %v83
    %v568 = vunpack.c.l.b16 %v84
    %v569 = vunpack.c.l.b16 %v85
    %v570 = vunpack.c.l.b16 %v86
    %v571 = vunpack.c.l.b16 %v87
    %v572 = vunpack.c.l.b16 %v88
    %v573 = vunpack.c.l.b16 %v89
    %v574 = vunpack.c.l.b16 %v90
    %v575 = vpack.c.b16 %v544, %v543
    %v576 = vpack.c.b16 %v546, %v545
    %v577 = vpack.c.b16 %v548, %v547
    %v578 = vpack.c.b16 %v550, %v549
    %v579 = vpack.c.b16 %v552, %v551
    %v580 = vpack.c.b16 %v554, %v553
    %v581 = vpack.c.b16 %v556, %v555
    %v582 = vpack.c.b16 %v558, %v557
    %v583 = vpack.c.b16 %v560, %v559
    %v584 = vpack.c.b16 %v562, %v561
    %v585 = vpack.c.b16 %v564, %v563
    %v586 = vpack.c.b16 %v566, %v565
    %v587 = vpack.c.b16 %v568, %v567
    %v588 = vpack.c.b16 %v570, %v569
    %v589 = vpack.c.b16 %v572, %v571
    %v590 = vpack.c.b16 %v574, %v573
    %v623 = vunpack.c.l.b16 %v479
    %v624 = vunpack.c.l.b16 %v480
    %v625 = vunpack.c.l.b16 %v481
    %v626 = vunpack.c.l.b16 %v482
    %v627 = vunpack.c.l.b16 %v483
    %v628 = vunpack.c.l.b16 %v484
    %v629 = vunpack.c.l.b16 %v485
    %v630 = vunpack.c.l.b16 %v486
    %v631 = vunpack.c.l.b16 %v487
    %v632 = vunpack.c.l.b16 %v488
    %v633 = vunpack.c.l.b16 %v489
    %v634 = vunpack.c.l.b16 %v490
    %v635 = vunpack.c.l.b16 %v491
    %v636 = vunpack.c.l.b16 %v492
    %v637 = vunpack.c.l.b16 %v493
    %v638 = vunpack.c.l.b16 %v494
    %v639 = vunpack.c.l.b16 %v495
    %v640 = vunpack.c.l.b16 %v496
    %v641 = vunpack.c.l.b16 %v497
    %v642 = vunpack.c.l.b16 %v498
    %v643 = vunpack.c.l.b16 %v499
    %v644 = vunpack.c.l.b16 %v500
    %v645 = vunpack.c.l.b16 %v501
    %v646 = vunpack.c.l.b16 %v502
    %v647 = vunpack.c.l.b16 %v503
    %v648 = vunpack.c.l.b16 %v504
    %v649 = vunpack.c.l.b16 %v505
    %v650 = vunpack.c.l.b16 %v506
    %v651 = vunpack.c.l.b16 %v507
    %v652 = vunpack.c.l.b16 %v508
    %v653 = vunpack.c.l.b16 %v509
    %v654 = vunpack.c.l.b16 %v510
    %v655 = vpack.c.b16 %v624, %v623
    %v656 = vpack.c.b16 %v626, %v625
    %v657 = vpack.c.b16 %v628, %v627
    %v658 = vpack.c.b16 %v630, %v629
    %v659 = vpack.c.b16 %v632, %v631
    %v660 = vpack.c.b16 %v634, %v633
    %v661 = vpack.c.b16 %v636, %v635
    %v662 = vpack.c.b16 %v638, %v637
    %v663 = vpack.c.b16 %v640, %v639
    %v664 = vpack.c.b16 %v642, %v641
    %v665 = vpack.c.b16 %v644, %v643
    %v666 = vpack.c.b16 %v646, %v645
    %v667 = vpack.c.b16 %v648, %v647
    %v668 = vpack.c.b16 %v650, %v649
    %v669 = vpack.c.b16 %v652, %v651
    %v670 = vpack.c.b16 %v654, %v653
    %671 = vrot.lane.b32.xlu0 %v655, 32
    %v672 = vpop.permute.xlu0 %671
    %673 = vrot.lane.b32.xlu0 %v656, 32
    %v674 = vpop.permute.xlu0 %673
    %675 = vrot.lane.b32.xlu0 %v657, 32
    %v676 = vpop.permute.xlu0 %675
    %677 = vrot.lane.b32.xlu0 %v658, 32
    %v678 = vpop.permute.xlu0 %677
    %679 = vrot.lane.b32.xlu0 %v659, 32
    %v680 = vpop.permute.xlu0 %679
    %681 = vrot.lane.b32.xlu0 %v660, 32
    %v682 = vpop.permute.xlu0 %681
    %683 = vrot.lane.b32.xlu0 %v661, 32
    %v684 = vpop.permute.xlu0 %683
    %685 = vrot.lane.b32.xlu0 %v662, 32
    %v686 = vpop.permute.xlu0 %685
    %687 = vrot.lane.b32.xlu0 %v663, 32
    %v688 = vpop.permute.xlu0 %687
    %689 = vrot.lane.b32.xlu0 %v664, 32
    %v690 = vpop.permute.xlu0 %689
    %691 = vrot.lane.b32.xlu0 %v665, 32
    %v692 = vpop.permute.xlu0 %691
    %693 = vrot.lane.b32.xlu0 %v666, 32
    %v694 = vpop.permute.xlu0 %693
    %695 = vrot.lane.b32.xlu0 %v667, 32
    %v696 = vpop.permute.xlu0 %695
    %697 = vrot.lane.b32.xlu0 %v668, 32
    %v698 = vpop.permute.xlu0 %697
    %699 = vrot.lane.b32.xlu0 %v669, 32
    %v700 = vpop.permute.xlu0 %699
    %701 = vrot.lane.b32.xlu0 %v670, 32
    %v702 = vpop.permute.xlu0 %701
    %vm703 = vcmask 261120
    %v706 = vsel %vm703, %v575, %v672
    %v709 = vsel %vm703, %v576, %v674
    %v712 = vsel %vm703, %v577, %v676
    %v715 = vsel %vm703, %v578, %v678
    %v718 = vsel %vm703, %v579, %v680
    %v721 = vsel %vm703, %v580, %v682
    %v724 = vsel %vm703, %v581, %v684
    %v727 = vsel %vm703, %v582, %v686
    %v730 = vsel %vm703, %v583, %v688
    %v733 = vsel %vm703, %v584, %v690
    %v736 = vsel %vm703, %v585, %v692
    %v739 = vsel %vm703, %v586, %v694
    %v742 = vsel %vm703, %v587, %v696
    %v745 = vsel %vm703, %v588, %v698
    %v748 = vsel %vm703, %v589, %v700
    %v751 = vsel %vm703, %v590, %v702
    %v752 = vld [vmem:[%s4] sm:$0xf]
    %v753 = vld [vmem:[%s4 + $0x4] sm:$0xf]
    %v754 = vld [vmem:[%s4 + $0x8] sm:$0xf]
    %v755 = vld [vmem:[%s4 + $0xc] sm:$0xf]
    %v756 = vld [vmem:[%s4 + $0x10] sm:$0xf]
    %v757 = vld [vmem:[%s4 + $0x14] sm:$0xf]
    %v758 = vld [vmem:[%s4 + $0x18] sm:$0xf]
    %v759 = vld [vmem:[%s4 + $0x1c] sm:$0xf]
    %v760 = vld [vmem:[%s3] sm:$0xf]
    %v761 = vld [vmem:[%s3 + $0x4] sm:$0xf]
    %v762 = vld [vmem:[%s3 + $0x8] sm:$0xf]
    %v763 = vld [vmem:[%s3 + $0xc] sm:$0xf]
    %v764 = vld [vmem:[%s5] sm:$0x1]
    %v766 = vperm.slane %v764, 0
    %v768 = vunpack.c.l.b16 %v55
    %v769 = vunpack.c.l.b16 %v56
    %v770 = vunpack.c.l.b16 %v57
    %v771 = vunpack.c.l.b16 %v58
    %v772 = vpack.c.b16 %v769, %v768
    %v773 = vpack.c.b16 %v771, %v770
    %v778 = vunpack.c.l.b16 %v760
    %v779 = vunpack.c.l.b16 %v761
    %v780 = vunpack.c.l.b16 %v762
    %v781 = vunpack.c.l.b16 %v763
    %v782 = vpack.c.b16 %v779, %v778
    %v783 = vpack.c.b16 %v781, %v780
    %v787 = vsel %vm703, %v772, 0
    %v790 = vsel %vm703, %v773, 0
    %792 = vmatpush.bf16.msra.mxu0 0
    %793 = vmatpush.bf16.msra.mxu0 0
    %794 = vmatpush.bf16.msra.mxu0 0
    %795 = vmatpush.bf16.msra.mxu0 0
    %796 = vmatpush.bf16.msra.mxu0 0
    %797 = vmatpush.bf16.msra.mxu0 0
    %798 = vmatpush.bf16.msra.mxu0 %v783
    %799 = vmatpush.bf16.msra.mxu0 %v782
    %800 = vmatmul.bf16.gmra.mxu0 %v787
    %v801 = vpop.f32.mrf.mxu0
    %v802 = vadd.f32 %v766, %v801
    %v803 = vpop.f32.mrf.mxu0
    %v804 = vadd.f32 %v766, %v803
    %805 = vmatmul.bf16.gmra.mxu0 %v790
    %v806 = vpop.f32.mrf.mxu0
    %v807 = vadd.f32 %v766, %v806
    %v808 = vpop.f32.mrf.mxu0
    %v809 = vadd.f32 %v766, %v808
    %810 = vdwg.mxu0
    %v815 = vrot.slane %v802, 1
    %v816 = vrot.slane %v802, 2
    %v817 = vrot.slane %v802, 3
    %v818 = vrot.slane %v802, 4
    %v819 = vrot.slane %v802, 5
    %v820 = vrot.slane %v802, 6
    %v821 = vrot.slane %v802, 7
    %v822 = vrot.slane %v804, 1
    %v823 = vrot.slane %v804, 2
    %v824 = vrot.slane %v804, 3
    %v825 = vrot.slane %v804, 4
    %v826 = vrot.slane %v804, 5
    %v827 = vrot.slane %v804, 6
    %v828 = vrot.slane %v804, 7
    %v829 = vrot.slane %v807, 1
    %v830 = vrot.slane %v807, 2
    %v831 = vrot.slane %v807, 3
    %v832 = vrot.slane %v807, 4
    %v833 = vrot.slane %v807, 5
    %v834 = vrot.slane %v807, 6
    %v835 = vrot.slane %v807, 7
    %v836 = vrot.slane %v809, 1
    %v837 = vrot.slane %v809, 2
    %v838 = vrot.slane %v809, 3
    %v839 = vrot.slane %v809, 4
    %v840 = vrot.slane %v809, 5
    %v841 = vrot.slane %v809, 6
    %v842 = vrot.slane %v809, 7
    %v843 = vperm.slane %v802, 0
    %v844 = vperm.slane %v815, 0
    %v845 = vperm.slane %v816, 0
    %v846 = vperm.slane %v817, 0
    %v847 = vperm.slane %v818, 0
    %v848 = vperm.slane %v819, 0
    %v849 = vperm.slane %v820, 0
    %v850 = vperm.slane %v821, 0
    %v851 = vperm.slane %v804, 0
    %v852 = vperm.slane %v822, 0
    %v853 = vperm.slane %v823, 0
    %v854 = vperm.slane %v824, 0
    %v855 = vperm.slane %v825, 0
    %v856 = vperm.slane %v826, 0
    %v857 = vperm.slane %v827, 0
    %v858 = vperm.slane %v828, 0
    %v859 = vperm.slane %v807, 0
    %v860 = vperm.slane %v829, 0
    %v861 = vperm.slane %v830, 0
    %v862 = vperm.slane %v831, 0
    %v863 = vperm.slane %v832, 0
    %v864 = vperm.slane %v833, 0
    %v865 = vperm.slane %v834, 0
    %v866 = vperm.slane %v835, 0
    %v867 = vperm.slane %v809, 0
    %v868 = vperm.slane %v836, 0
    %v869 = vperm.slane %v837, 0
    %v870 = vperm.slane %v838, 0
    %v871 = vperm.slane %v839, 0
    %v872 = vperm.slane %v840, 0
    %v873 = vperm.slane %v841, 0
    %v874 = vperm.slane %v842, 0
    %v915 = vunpack.c.l.b16 %v752
    %v916 = vunpack.c.l.b16 %v753
    %v917 = vunpack.c.l.b16 %v754
    %v918 = vunpack.c.l.b16 %v755
    %v919 = vunpack.c.l.b16 %v756
    %v920 = vunpack.c.l.b16 %v757
    %v921 = vunpack.c.l.b16 %v758
    %v922 = vunpack.c.l.b16 %v759
    %v923 = vpack.c.b16 %v916, %v915
    %v924 = vpack.c.b16 %v918, %v917
    %v925 = vpack.c.b16 %v920, %v919
    %v926 = vpack.c.b16 %v922, %v921
    %vm931 = vcmask 523264
    %v932 = vsel %vm931, %v706, 0
    %v934 = vsel %vm931, %v709, 0
    %v936 = vsel %vm931, %v712, 0
    %v938 = vsel %vm931, %v715, 0
    %v940 = vsel %vm931, %v718, 0
    %v942 = vsel %vm931, %v721, 0
    %v944 = vsel %vm931, %v724, 0
    %v946 = vsel %vm931, %v727, 0
    %v948 = vsel %vm931, %v730, 0
    %v950 = vsel %vm931, %v733, 0
    %v952 = vsel %vm931, %v736, 0
    %v954 = vsel %vm931, %v739, 0
    %v956 = vsel %vm931, %v742, 0
    %v958 = vsel %vm931, %v745, 0
    %v960 = vsel %vm931, %v748, 0
    %v962 = vsel %vm931, %v751, 0
    %964 = vmatpush.bf16.msra.mxu0 0
    %965 = vmatpush.bf16.msra.mxu0 0
    %966 = vmatpush.bf16.msra.mxu0 0
    %967 = vmatpush.bf16.msra.mxu0 0
    %968 = vmatpush.bf16.msra.mxu0 %v926
    %969 = vmatpush.bf16.msra.mxu0 %v925
    %970 = vmatpush.bf16.msra.mxu0 %v924
    %971 = vmatpush.bf16.msra.mxu0 %v923
    %972 = vmatmul.bf16.gmra.mxu0 %v932
    %v973 = vpop.f32.mrf.mxu0
    %v974 = vadd.f32 %v843, %v973
    %v975 = vpop.f32.mrf.mxu0
    %v976 = vadd.f32 %v844, %v975
    %977 = vmatmul.bf16.gmra.mxu0 %v934
    %v978 = vpop.f32.mrf.mxu0
    %v979 = vadd.f32 %v845, %v978
    %v980 = vpop.f32.mrf.mxu0
    %v981 = vadd.f32 %v846, %v980
    %982 = vmatmul.bf16.gmra.mxu0 %v936
    %v983 = vpop.f32.mrf.mxu0
    %v984 = vadd.f32 %v847, %v983
    %v985 = vpop.f32.mrf.mxu0
    %v986 = vadd.f32 %v848, %v985
    %987 = vmatmul.bf16.gmra.mxu0 %v938
    %v988 = vpop.f32.mrf.mxu0
    %v989 = vadd.f32 %v849, %v988
    %v990 = vpop.f32.mrf.mxu0
    %v991 = vadd.f32 %v850, %v990
    %992 = vmatmul.bf16.gmra.mxu0 %v940
    %v993 = vpop.f32.mrf.mxu0
    %v994 = vadd.f32 %v851, %v993
    %v995 = vpop.f32.mrf.mxu0
    %v996 = vadd.f32 %v852, %v995
    %997 = vmatmul.bf16.gmra.mxu0 %v942
    %v998 = vpop.f32.mrf.mxu0
    %v999 = vadd.f32 %v853, %v998
    %v1000 = vpop.f32.mrf.mxu0
    %v1001 = vadd.f32 %v854, %v1000
    %1002 = vmatmul.bf16.gmra.mxu0 %v944
    %v1003 = vpop.f32.mrf.mxu0
    %v1004 = vadd.f32 %v855, %v1003
    %v1005 = vpop.f32.mrf.mxu0
    %v1006 = vadd.f32 %v856, %v1005
    %1007 = vmatmul.bf16.gmra.mxu0 %v946
    %v1008 = vpop.f32.mrf.mxu0
    %v1009 = vadd.f32 %v857, %v1008
    %v1010 = vpop.f32.mrf.mxu0
    %v1011 = vadd.f32 %v858, %v1010
    %1012 = vmatmul.bf16.gmra.mxu0 %v948
    %v1013 = vpop.f32.mrf.mxu0
    %v1014 = vadd.f32 %v859, %v1013
    %v1015 = vpop.f32.mrf.mxu0
    %v1016 = vadd.f32 %v860, %v1015
    %1017 = vmatmul.bf16.gmra.mxu0 %v950
    %v1018 = vpop.f32.mrf.mxu0
    %v1019 = vadd.f32 %v861, %v1018
    %v1020 = vpop.f32.mrf.mxu0
    %v1021 = vadd.f32 %v862, %v1020
    %1022 = vmatmul.bf16.gmra.mxu0 %v952
    %v1023 = vpop.f32.mrf.mxu0
    %v1024 = vadd.f32 %v863, %v1023
    %v1025 = vpop.f32.mrf.mxu0
    %v1026 = vadd.f32 %v864, %v1025
    %1027 = vmatmul.bf16.gmra.mxu0 %v954
    %v1028 = vpop.f32.mrf.mxu0
    %v1029 = vadd.f32 %v865, %v1028
    %v1030 = vpop.f32.mrf.mxu0
    %v1031 = vadd.f32 %v866, %v1030
    %1032 = vmatmul.bf16.gmra.mxu0 %v956
    %v1033 = vpop.f32.mrf.mxu0
    %v1034 = vadd.f32 %v867, %v1033
    %v1035 = vpop.f32.mrf.mxu0
    %v1036 = vadd.f32 %v868, %v1035
    %1037 = vmatmul.bf16.gmra.mxu0 %v958
    %v1038 = vpop.f32.mrf.mxu0
    %v1039 = vadd.f32 %v869, %v1038
    %v1040 = vpop.f32.mrf.mxu0
    %v1041 = vadd.f32 %v870, %v1040
    %1042 = vmatmul.bf16.gmra.mxu0 %v960
    %v1043 = vpop.f32.mrf.mxu0
    %v1044 = vadd.f32 %v871, %v1043
    %v1045 = vpop.f32.mrf.mxu0
    %v1046 = vadd.f32 %v872, %v1045
    %1047 = vmatmul.bf16.gmra.mxu0 %v962
    %v1048 = vpop.f32.mrf.mxu0
    %v1049 = vadd.f32 %v873, %v1048
    %v1050 = vpop.f32.mrf.mxu0
    %v1051 = vadd.f32 %v874, %v1050
    %1052 = vdwg.mxu0
    %v1053 = vxor.u32 %v974, 2147483648
    %v1054 = vxor.u32 %v976, 2147483648
    %v1055 = vxor.u32 %v979, 2147483648
    %v1056 = vxor.u32 %v981, 2147483648
    %v1057 = vxor.u32 %v984, 2147483648
    %v1058 = vxor.u32 %v986, 2147483648
    %v1059 = vxor.u32 %v989, 2147483648
    %v1060 = vxor.u32 %v991, 2147483648
    %v1061 = vxor.u32 %v994, 2147483648
    %v1062 = vxor.u32 %v996, 2147483648
    %v1063 = vxor.u32 %v999, 2147483648
    %v1064 = vxor.u32 %v1001, 2147483648
    %v1065 = vxor.u32 %v1004, 2147483648
    %v1066 = vxor.u32 %v1006, 2147483648
    %v1067 = vxor.u32 %v1009, 2147483648
    %v1068 = vxor.u32 %v1011, 2147483648
    %v1069 = vxor.u32 %v1014, 2147483648
    %v1070 = vxor.u32 %v1016, 2147483648
    %v1071 = vxor.u32 %v1019, 2147483648
    %v1072 = vxor.u32 %v1021, 2147483648
    %v1073 = vxor.u32 %v1024, 2147483648
    %v1074 = vxor.u32 %v1026, 2147483648
    %v1075 = vxor.u32 %v1029, 2147483648
    %v1076 = vxor.u32 %v1031, 2147483648
    %v1077 = vxor.u32 %v1034, 2147483648
    %v1078 = vxor.u32 %v1036, 2147483648
    %v1079 = vxor.u32 %v1039, 2147483648
    %v1080 = vxor.u32 %v1041, 2147483648
    %v1081 = vxor.u32 %v1044, 2147483648
    %v1082 = vxor.u32 %v1046, 2147483648
    %v1083 = vxor.u32 %v1049, 2147483648
    %v1084 = vxor.u32 %v1051, 2147483648
    %v1085 = vmul.f32 %v1053, 1.442695
    %v1086 = vpow.pop %v1085
    %v1087 = vmul.f32 %v1054, 1.442695
    %v1088 = vpow.pop %v1087
    %v1089 = vmul.f32 %v1055, 1.442695
    %v1090 = vpow.pop %v1089
    %v1091 = vmul.f32 %v1056, 1.442695
    %v1092 = vpow.pop %v1091
    %v1093 = vmul.f32 %v1057, 1.442695
    %v1094 = vpow.pop %v1093
    %v1095 = vmul.f32 %v1058, 1.442695
    %v1096 = vpow.pop %v1095
    %v1097 = vmul.f32 %v1059, 1.442695
    %v1098 = vpow.pop %v1097
    %v1099 = vmul.f32 %v1060, 1.442695
    %v1100 = vpow.pop %v1099
    %v1101 = vmul.f32 %v1061, 1.442695
    %v1102 = vpow.pop %v1101
    %v1103 = vmul.f32 %v1062, 1.442695
    %v1104 = vpow.pop %v1103
    %v1105 = vmul.f32 %v1063, 1.442695
    %v1106 = vpow.pop %v1105
    %v1107 = vmul.f32 %v1064, 1.442695
    %v1108 = vpow.pop %v1107
    %v1109 = vmul.f32 %v1065, 1.442695
    %v1110 = vpow.pop %v1109
    %v1111 = vmul.f32 %v1066, 1.442695
    %v1112 = vpow.pop %v1111
    %v1113 = vmul.f32 %v1067, 1.442695
    %v1114 = vpow.pop %v1113
    %v1115 = vmul.f32 %v1068, 1.442695
    %v1116 = vpow.pop %v1115
    %v1117 = vmul.f32 %v1069, 1.442695
    %v1118 = vpow.pop %v1117
    %v1119 = vmul.f32 %v1070, 1.442695
    %v1120 = vpow.pop %v1119
    %v1121 = vmul.f32 %v1071, 1.442695
    %v1122 = vpow.pop %v1121
    %v1123 = vmul.f32 %v1072, 1.442695
    %v1124 = vpow.pop %v1123
    %v1125 = vmul.f32 %v1073, 1.442695
    %v1126 = vpow.pop %v1125
    %v1127 = vmul.f32 %v1074, 1.442695
    %v1128 = vpow.pop %v1127
    %v1129 = vmul.f32 %v1075, 1.442695
    %v1130 = vpow.pop %v1129
    %v1131 = vmul.f32 %v1076, 1.442695
    %v1132 = vpow.pop %v1131
    %v1133 = vmul.f32 %v1077, 1.442695
    %v1134 = vpow.pop %v1133
    %v1135 = vmul.f32 %v1078, 1.442695
    %v1136 = vpow.pop %v1135
    %v1137 = vmul.f32 %v1079, 1.442695
    %v1138 = vpow.pop %v1137
    %v1139 = vmul.f32 %v1080, 1.442695
    %v1140 = vpow.pop %v1139
    %v1141 = vmul.f32 %v1081, 1.442695
    %v1142 = vpow.pop %v1141
    %v1143 = vmul.f32 %v1082, 1.442695
    %v1144 = vpow.pop %v1143
    %v1145 = vmul.f32 %v1083, 1.442695
    %v1146 = vpow.pop %v1145
    %v1147 = vmul.f32 %v1084, 1.442695
    %v1148 = vpow.pop %v1147
    %v1149 = vadd.f32 %v1086, 1.0
    %v1150 = vadd.f32 %v1088, 1.0
    %v1151 = vadd.f32 %v1090, 1.0
    %v1152 = vadd.f32 %v1092, 1.0
    %v1153 = vadd.f32 %v1094, 1.0
    %v1154 = vadd.f32 %v1096, 1.0
    %v1155 = vadd.f32 %v1098, 1.0
    %v1156 = vadd.f32 %v1100, 1.0
    %v1157 = vadd.f32 %v1102, 1.0
    %v1158 = vadd.f32 %v1104, 1.0
    %v1159 = vadd.f32 %v1106, 1.0
    %v1160 = vadd.f32 %v1108, 1.0
    %v1161 = vadd.f32 %v1110, 1.0
    %v1162 = vadd.f32 %v1112, 1.0
    %v1163 = vadd.f32 %v1114, 1.0
    %v1164 = vadd.f32 %v1116, 1.0
    %v1165 = vadd.f32 %v1118, 1.0
    %v1166 = vadd.f32 %v1120, 1.0
    %v1167 = vadd.f32 %v1122, 1.0
    %v1168 = vadd.f32 %v1124, 1.0
    %v1169 = vadd.f32 %v1126, 1.0
    %v1170 = vadd.f32 %v1128, 1.0
    %v1171 = vadd.f32 %v1130, 1.0
    %v1172 = vadd.f32 %v1132, 1.0
    %v1173 = vadd.f32 %v1134, 1.0
    %v1174 = vadd.f32 %v1136, 1.0
    %v1175 = vadd.f32 %v1138, 1.0
    %v1176 = vadd.f32 %v1140, 1.0
    %v1177 = vadd.f32 %v1142, 1.0
    %v1178 = vadd.f32 %v1144, 1.0
    %v1179 = vadd.f32 %v1146, 1.0
    %v1180 = vadd.f32 %v1148, 1.0
    %v1181 = vrcp.pop %v1149
    %v1182 = vmul.f32 %v1149, %v1181
    %v1183 = vsub.f32 1.0, %v1182
    %v1184 = vmul.f32 %v1181, %v1183
    %v1185 = vadd.f32 %v1181, %v1184
    %vm1186 = vweird.f32 %v1149
    %vm1187 = vweird.f32 %v1181
    %vm1188 = vmor %vm1186, %vm1187
    %v1189 = vsel %vm1188, %v1181, %v1185
    %v1190 = vand.u32 2147483647, %v1149
    %vm1191 = vcmp.eq.f32.partialorder %v1190, 8.507059e+37
    %v1192 = vand.u32 %v1149, 2147483648
    %v1193 = vor.u32 1.1754944e-38, %v1192
    %v1194 = vsel %vm1191, %v1193, %v1189
    %v1195 = vmul.f32 1.0, %v1194
    %v1196 = vrcp.pop %v1150
    %v1197 = vmul.f32 %v1150, %v1196
    %v1198 = vsub.f32 1.0, %v1197
    %v1199 = vmul.f32 %v1196, %v1198
    %v1200 = vadd.f32 %v1196, %v1199
    %vm1201 = vweird.f32 %v1150
    %vm1202 = vweird.f32 %v1196
    %vm1203 = vmor %vm1201, %vm1202
    %v1204 = vsel %vm1203, %v1196, %v1200
    %v1205 = vand.u32 2147483647, %v1150
    %vm1206 = vcmp.eq.f32.partialorder %v1205, 8.507059e+37
    %v1207 = vand.u32 %v1150, 2147483648
    %v1208 = vor.u32 1.1754944e-38, %v1207
    %v1209 = vsel %vm1206, %v1208, %v1204
    %v1210 = vmul.f32 1.0, %v1209
    %v1211 = vrcp.pop %v1151
    %v1212 = vmul.f32 %v1151, %v1211
    %v1213 = vsub.f32 1.0, %v1212
    %v1214 = vmul.f32 %v1211, %v1213
    %v1215 = vadd.f32 %v1211, %v1214
    %vm1216 = vweird.f32 %v1151
    %vm1217 = vweird.f32 %v1211
    %vm1218 = vmor %vm1216, %vm1217
    %v1219 = vsel %vm1218, %v1211, %v1215
    %v1220 = vand.u32 2147483647, %v1151
    %vm1221 = vcmp.eq.f32.partialorder %v1220, 8.507059e+37
    %v1222 = vand.u32 %v1151, 2147483648
    %v1223 = vor.u32 1.1754944e-38, %v1222
    %v1224 = vsel %vm1221, %v1223, %v1219
    %v1225 = vmul.f32 1.0, %v1224
    %v1226 = vrcp.pop %v1152
    %v1227 = vmul.f32 %v1152, %v1226
    %v1228 = vsub.f32 1.0, %v1227
    %v1229 = vmul.f32 %v1226, %v1228
    %v1230 = vadd.f32 %v1226, %v1229
    %vm1231 = vweird.f32 %v1152
    %vm1232 = vweird.f32 %v1226
    %vm1233 = vmor %vm1231, %vm1232
    %v1234 = vsel %vm1233, %v1226, %v1230
    %v1235 = vand.u32 2147483647, %v1152
    %vm1236 = vcmp.eq.f32.partialorder %v1235, 8.507059e+37
    %v1237 = vand.u32 %v1152, 2147483648
    %v1238 = vor.u32 1.1754944e-38, %v1237
    %v1239 = vsel %vm1236, %v1238, %v1234
    %v1240 = vmul.f32 1.0, %v1239
    %v1241 = vrcp.pop %v1153
    %v1242 = vmul.f32 %v1153, %v1241
    %v1243 = vsub.f32 1.0, %v1242
    %v1244 = vmul.f32 %v1241, %v1243
    %v1245 = vadd.f32 %v1241, %v1244
    %vm1246 = vweird.f32 %v1153
    %vm1247 = vweird.f32 %v1241
    %vm1248 = vmor %vm1246, %vm1247
    %v1249 = vsel %vm1248, %v1241, %v1245
    %v1250 = vand.u32 2147483647, %v1153
    %vm1251 = vcmp.eq.f32.partialorder %v1250, 8.507059e+37
    %v1252 = vand.u32 %v1153, 2147483648
    %v1253 = vor.u32 1.1754944e-38, %v1252
    %v1254 = vsel %vm1251, %v1253, %v1249
    %v1255 = vmul.f32 1.0, %v1254
    %v1256 = vrcp.pop %v1154
    %v1257 = vmul.f32 %v1154, %v1256
    %v1258 = vsub.f32 1.0, %v1257
    %v1259 = vmul.f32 %v1256, %v1258
    %v1260 = vadd.f32 %v1256, %v1259
    %vm1261 = vweird.f32 %v1154
    %vm1262 = vweird.f32 %v1256
    %vm1263 = vmor %vm1261, %vm1262
    %v1264 = vsel %vm1263, %v1256, %v1260
    %v1265 = vand.u32 2147483647, %v1154
    %vm1266 = vcmp.eq.f32.partialorder %v1265, 8.507059e+37
    %v1267 = vand.u32 %v1154, 2147483648
    %v1268 = vor.u32 1.1754944e-38, %v1267
    %v1269 = vsel %vm1266, %v1268, %v1264
    %v1270 = vmul.f32 1.0, %v1269
    %v1271 = vrcp.pop %v1155
    %v1272 = vmul.f32 %v1155, %v1271
    %v1273 = vsub.f32 1.0, %v1272
    %v1274 = vmul.f32 %v1271, %v1273
    %v1275 = vadd.f32 %v1271, %v1274
    %vm1276 = vweird.f32 %v1155
    %vm1277 = vweird.f32 %v1271
    %vm1278 = vmor %vm1276, %vm1277
    %v1279 = vsel %vm1278, %v1271, %v1275
    %v1280 = vand.u32 2147483647, %v1155
    %vm1281 = vcmp.eq.f32.partialorder %v1280, 8.507059e+37
    %v1282 = vand.u32 %v1155, 2147483648
    %v1283 = vor.u32 1.1754944e-38, %v1282
    %v1284 = vsel %vm1281, %v1283, %v1279
    %v1285 = vmul.f32 1.0, %v1284
    %v1286 = vrcp.pop %v1156
    %v1287 = vmul.f32 %v1156, %v1286
    %v1288 = vsub.f32 1.0, %v1287
    %v1289 = vmul.f32 %v1286, %v1288
    %v1290 = vadd.f32 %v1286, %v1289
    %vm1291 = vweird.f32 %v1156
    %vm1292 = vweird.f32 %v1286
    %vm1293 = vmor %vm1291, %vm1292
    %v1294 = vsel %vm1293, %v1286, %v1290
    %v1295 = vand.u32 2147483647, %v1156
    %vm1296 = vcmp.eq.f32.partialorder %v1295, 8.507059e+37
    %v1297 = vand.u32 %v1156, 2147483648
    %v1298 = vor.u32 1.1754944e-38, %v1297
    %v1299 = vsel %vm1296, %v1298, %v1294
    %v1300 = vmul.f32 1.0, %v1299
    %v1301 = vrcp.pop %v1157
    %v1302 = vmul.f32 %v1157, %v1301
    %v1303 = vsub.f32 1.0, %v1302
    %v1304 = vmul.f32 %v1301, %v1303
    %v1305 = vadd.f32 %v1301, %v1304
    %vm1306 = vweird.f32 %v1157
    %vm1307 = vweird.f32 %v1301
    %vm1308 = vmor %vm1306, %vm1307
    %v1309 = vsel %vm1308, %v1301, %v1305
    %v1310 = vand.u32 2147483647, %v1157
    %vm1311 = vcmp.eq.f32.partialorder %v1310, 8.507059e+37
    %v1312 = vand.u32 %v1157, 2147483648
    %v1313 = vor.u32 1.1754944e-38, %v1312
    %v1314 = vsel %vm1311, %v1313, %v1309
    %v1315 = vmul.f32 1.0, %v1314
    %v1316 = vrcp.pop %v1158
    %v1317 = vmul.f32 %v1158, %v1316
    %v1318 = vsub.f32 1.0, %v1317
    %v1319 = vmul.f32 %v1316, %v1318
    %v1320 = vadd.f32 %v1316, %v1319
    %vm1321 = vweird.f32 %v1158
    %vm1322 = vweird.f32 %v1316
    %vm1323 = vmor %vm1321, %vm1322
    %v1324 = vsel %vm1323, %v1316, %v1320
    %v1325 = vand.u32 2147483647, %v1158
    %vm1326 = vcmp.eq.f32.partialorder %v1325, 8.507059e+37
    %v1327 = vand.u32 %v1158, 2147483648
    %v1328 = vor.u32 1.1754944e-38, %v1327
    %v1329 = vsel %vm1326, %v1328, %v1324
    %v1330 = vmul.f32 1.0, %v1329
    %v1331 = vrcp.pop %v1159
    %v1332 = vmul.f32 %v1159, %v1331
    %v1333 = vsub.f32 1.0, %v1332
    %v1334 = vmul.f32 %v1331, %v1333
    %v1335 = vadd.f32 %v1331, %v1334
    %vm1336 = vweird.f32 %v1159
    %vm1337 = vweird.f32 %v1331
    %vm1338 = vmor %vm1336, %vm1337
    %v1339 = vsel %vm1338, %v1331, %v1335
    %v1340 = vand.u32 2147483647, %v1159
    %vm1341 = vcmp.eq.f32.partialorder %v1340, 8.507059e+37
    %v1342 = vand.u32 %v1159, 2147483648
    %v1343 = vor.u32 1.1754944e-38, %v1342
    %v1344 = vsel %vm1341, %v1343, %v1339
    %v1345 = vmul.f32 1.0, %v1344
    %v1346 = vrcp.pop %v1160
    %v1347 = vmul.f32 %v1160, %v1346
    %v1348 = vsub.f32 1.0, %v1347
    %v1349 = vmul.f32 %v1346, %v1348
    %v1350 = vadd.f32 %v1346, %v1349
    %vm1351 = vweird.f32 %v1160
    %vm1352 = vweird.f32 %v1346
    %vm1353 = vmor %vm1351, %vm1352
    %v1354 = vsel %vm1353, %v1346, %v1350
    %v1355 = vand.u32 2147483647, %v1160
    %vm1356 = vcmp.eq.f32.partialorder %v1355, 8.507059e+37
    %v1357 = vand.u32 %v1160, 2147483648
    %v1358 = vor.u32 1.1754944e-38, %v1357
    %v1359 = vsel %vm1356, %v1358, %v1354
    %v1360 = vmul.f32 1.0, %v1359
    %v1361 = vrcp.pop %v1161
    %v1362 = vmul.f32 %v1161, %v1361
    %v1363 = vsub.f32 1.0, %v1362
    %v1364 = vmul.f32 %v1361, %v1363
    %v1365 = vadd.f32 %v1361, %v1364
    %vm1366 = vweird.f32 %v1161
    %vm1367 = vweird.f32 %v1361
    %vm1368 = vmor %vm1366, %vm1367
    %v1369 = vsel %vm1368, %v1361, %v1365
    %v1370 = vand.u32 2147483647, %v1161
    %vm1371 = vcmp.eq.f32.partialorder %v1370, 8.507059e+37
    %v1372 = vand.u32 %v1161, 2147483648
    %v1373 = vor.u32 1.1754944e-38, %v1372
    %v1374 = vsel %vm1371, %v1373, %v1369
    %v1375 = vmul.f32 1.0, %v1374
    %v1376 = vrcp.pop %v1162
    %v1377 = vmul.f32 %v1162, %v1376
    %v1378 = vsub.f32 1.0, %v1377
    %v1379 = vmul.f32 %v1376, %v1378
    %v1380 = vadd.f32 %v1376, %v1379
    %vm1381 = vweird.f32 %v1162
    %vm1382 = vweird.f32 %v1376
    %vm1383 = vmor %vm1381, %vm1382
    %v1384 = vsel %vm1383, %v1376, %v1380
    %v1385 = vand.u32 2147483647, %v1162
    %vm1386 = vcmp.eq.f32.partialorder %v1385, 8.507059e+37
    %v1387 = vand.u32 %v1162, 2147483648
    %v1388 = vor.u32 1.1754944e-38, %v1387
    %v1389 = vsel %vm1386, %v1388, %v1384
    %v1390 = vmul.f32 1.0, %v1389
    %v1391 = vrcp.pop %v1163
    %v1392 = vmul.f32 %v1163, %v1391
    %v1393 = vsub.f32 1.0, %v1392
    %v1394 = vmul.f32 %v1391, %v1393
    %v1395 = vadd.f32 %v1391, %v1394
    %vm1396 = vweird.f32 %v1163
    %vm1397 = vweird.f32 %v1391
    %vm1398 = vmor %vm1396, %vm1397
    %v1399 = vsel %vm1398, %v1391, %v1395
    %v1400 = vand.u32 2147483647, %v1163
    %vm1401 = vcmp.eq.f32.partialorder %v1400, 8.507059e+37
    %v1402 = vand.u32 %v1163, 2147483648
    %v1403 = vor.u32 1.1754944e-38, %v1402
    %v1404 = vsel %vm1401, %v1403, %v1399
    %v1405 = vmul.f32 1.0, %v1404
    %v1406 = vrcp.pop %v1164
    %v1407 = vmul.f32 %v1164, %v1406
    %v1408 = vsub.f32 1.0, %v1407
    %v1409 = vmul.f32 %v1406, %v1408
    %v1410 = vadd.f32 %v1406, %v1409
    %vm1411 = vweird.f32 %v1164
    %vm1412 = vweird.f32 %v1406
    %vm1413 = vmor %vm1411, %vm1412
    %v1414 = vsel %vm1413, %v1406, %v1410
    %v1415 = vand.u32 2147483647, %v1164
    %vm1416 = vcmp.eq.f32.partialorder %v1415, 8.507059e+37
    %v1417 = vand.u32 %v1164, 2147483648
    %v1418 = vor.u32 1.1754944e-38, %v1417
    %v1419 = vsel %vm1416, %v1418, %v1414
    %v1420 = vmul.f32 1.0, %v1419
    %v1421 = vrcp.pop %v1165
    %v1422 = vmul.f32 %v1165, %v1421
    %v1423 = vsub.f32 1.0, %v1422
    %v1424 = vmul.f32 %v1421, %v1423
    %v1425 = vadd.f32 %v1421, %v1424
    %vm1426 = vweird.f32 %v1165
    %vm1427 = vweird.f32 %v1421
    %vm1428 = vmor %vm1426, %vm1427
    %v1429 = vsel %vm1428, %v1421, %v1425
    %v1430 = vand.u32 2147483647, %v1165
    %vm1431 = vcmp.eq.f32.partialorder %v1430, 8.507059e+37
    %v1432 = vand.u32 %v1165, 2147483648
    %v1433 = vor.u32 1.1754944e-38, %v1432
    %v1434 = vsel %vm1431, %v1433, %v1429
    %v1435 = vmul.f32 1.0, %v1434
    %v1436 = vrcp.pop %v1166
    %v1437 = vmul.f32 %v1166, %v1436
    %v1438 = vsub.f32 1.0, %v1437
    %v1439 = vmul.f32 %v1436, %v1438
    %v1440 = vadd.f32 %v1436, %v1439
    %vm1441 = vweird.f32 %v1166
    %vm1442 = vweird.f32 %v1436
    %vm1443 = vmor %vm1441, %vm1442
    %v1444 = vsel %vm1443, %v1436, %v1440
    %v1445 = vand.u32 2147483647, %v1166
    %vm1446 = vcmp.eq.f32.partialorder %v1445, 8.507059e+37
    %v1447 = vand.u32 %v1166, 2147483648
    %v1448 = vor.u32 1.1754944e-38, %v1447
    %v1449 = vsel %vm1446, %v1448, %v1444
    %v1450 = vmul.f32 1.0, %v1449
    %v1451 = vrcp.pop %v1167
    %v1452 = vmul.f32 %v1167, %v1451
    %v1453 = vsub.f32 1.0, %v1452
    %v1454 = vmul.f32 %v1451, %v1453
    %v1455 = vadd.f32 %v1451, %v1454
    %vm1456 = vweird.f32 %v1167
    %vm1457 = vweird.f32 %v1451
    %vm1458 = vmor %vm1456, %vm1457
    %v1459 = vsel %vm1458, %v1451, %v1455
    %v1460 = vand.u32 2147483647, %v1167
    %vm1461 = vcmp.eq.f32.partialorder %v1460, 8.507059e+37
    %v1462 = vand.u32 %v1167, 2147483648
    %v1463 = vor.u32 1.1754944e-38, %v1462
    %v1464 = vsel %vm1461, %v1463, %v1459
    %v1465 = vmul.f32 1.0, %v1464
    %v1466 = vrcp.pop %v1168
    %v1467 = vmul.f32 %v1168, %v1466
    %v1468 = vsub.f32 1.0, %v1467
    %v1469 = vmul.f32 %v1466, %v1468
    %v1470 = vadd.f32 %v1466, %v1469
    %vm1471 = vweird.f32 %v1168
    %vm1472 = vweird.f32 %v1466
    %vm1473 = vmor %vm1471, %vm1472
    %v1474 = vsel %vm1473, %v1466, %v1470
    %v1475 = vand.u32 2147483647, %v1168
    %vm1476 = vcmp.eq.f32.partialorder %v1475, 8.507059e+37
    %v1477 = vand.u32 %v1168, 2147483648
    %v1478 = vor.u32 1.1754944e-38, %v1477
    %v1479 = vsel %vm1476, %v1478, %v1474
    %v1480 = vmul.f32 1.0, %v1479
    %v1481 = vrcp.pop %v1169
    %v1482 = vmul.f32 %v1169, %v1481
    %v1483 = vsub.f32 1.0, %v1482
    %v1484 = vmul.f32 %v1481, %v1483
    %v1485 = vadd.f32 %v1481, %v1484
    %vm1486 = vweird.f32 %v1169
    %vm1487 = vweird.f32 %v1481
    %vm1488 = vmor %vm1486, %vm1487
    %v1489 = vsel %vm1488, %v1481, %v1485
    %v1490 = vand.u32 2147483647, %v1169
    %vm1491 = vcmp.eq.f32.partialorder %v1490, 8.507059e+37
    %v1492 = vand.u32 %v1169, 2147483648
    %v1493 = vor.u32 1.1754944e-38, %v1492
    %v1494 = vsel %vm1491, %v1493, %v1489
    %v1495 = vmul.f32 1.0, %v1494
    %v1496 = vrcp.pop %v1170
    %v1497 = vmul.f32 %v1170, %v1496
    %v1498 = vsub.f32 1.0, %v1497
    %v1499 = vmul.f32 %v1496, %v1498
    %v1500 = vadd.f32 %v1496, %v1499
    %vm1501 = vweird.f32 %v1170
    %vm1502 = vweird.f32 %v1496
    %vm1503 = vmor %vm1501, %vm1502
    %v1504 = vsel %vm1503, %v1496, %v1500
    %v1505 = vand.u32 2147483647, %v1170
    %vm1506 = vcmp.eq.f32.partialorder %v1505, 8.507059e+37
    %v1507 = vand.u32 %v1170, 2147483648
    %v1508 = vor.u32 1.1754944e-38, %v1507
    %v1509 = vsel %vm1506, %v1508, %v1504
    %v1510 = vmul.f32 1.0, %v1509
    %v1511 = vrcp.pop %v1171
    %v1512 = vmul.f32 %v1171, %v1511
    %v1513 = vsub.f32 1.0, %v1512
    %v1514 = vmul.f32 %v1511, %v1513
    %v1515 = vadd.f32 %v1511, %v1514
    %vm1516 = vweird.f32 %v1171
    %vm1517 = vweird.f32 %v1511
    %vm1518 = vmor %vm1516, %vm1517
    %v1519 = vsel %vm1518, %v1511, %v1515
    %v1520 = vand.u32 2147483647, %v1171
    %vm1521 = vcmp.eq.f32.partialorder %v1520, 8.507059e+37
    %v1522 = vand.u32 %v1171, 2147483648
    %v1523 = vor.u32 1.1754944e-38, %v1522
    %v1524 = vsel %vm1521, %v1523, %v1519
    %v1525 = vmul.f32 1.0, %v1524
    %v1526 = vrcp.pop %v1172
    %v1527 = vmul.f32 %v1172, %v1526
    %v1528 = vsub.f32 1.0, %v1527
    %v1529 = vmul.f32 %v1526, %v1528
    %v1530 = vadd.f32 %v1526, %v1529
    %vm1531 = vweird.f32 %v1172
    %vm1532 = vweird.f32 %v1526
    %vm1533 = vmor %vm1531, %vm1532
    %v1534 = vsel %vm1533, %v1526, %v1530
    %v1535 = vand.u32 2147483647, %v1172
    %vm1536 = vcmp.eq.f32.partialorder %v1535, 8.507059e+37
    %v1537 = vand.u32 %v1172, 2147483648
    %v1538 = vor.u32 1.1754944e-38, %v1537
    %v1539 = vsel %vm1536, %v1538, %v1534
    %v1540 = vmul.f32 1.0, %v1539
    %v1541 = vrcp.pop %v1173
    %v1542 = vmul.f32 %v1173, %v1541
    %v1543 = vsub.f32 1.0, %v1542
    %v1544 = vmul.f32 %v1541, %v1543
    %v1545 = vadd.f32 %v1541, %v1544
    %vm1546 = vweird.f32 %v1173
    %vm1547 = vweird.f32 %v1541
    %vm1548 = vmor %vm1546, %vm1547
    %v1549 = vsel %vm1548, %v1541, %v1545
    %v1550 = vand.u32 2147483647, %v1173
    %vm1551 = vcmp.eq.f32.partialorder %v1550, 8.507059e+37
    %v1552 = vand.u32 %v1173, 2147483648
    %v1553 = vor.u32 1.1754944e-38, %v1552
    %v1554 = vsel %vm1551, %v1553, %v1549
    %v1555 = vmul.f32 1.0, %v1554
    %v1556 = vrcp.pop %v1174
    %v1557 = vmul.f32 %v1174, %v1556
    %v1558 = vsub.f32 1.0, %v1557
    %v1559 = vmul.f32 %v1556, %v1558
    %v1560 = vadd.f32 %v1556, %v1559
    %vm1561 = vweird.f32 %v1174
    %vm1562 = vweird.f32 %v1556
    %vm1563 = vmor %vm1561, %vm1562
    %v1564 = vsel %vm1563, %v1556, %v1560
    %v1565 = vand.u32 2147483647, %v1174
    %vm1566 = vcmp.eq.f32.partialorder %v1565, 8.507059e+37
    %v1567 = vand.u32 %v1174, 2147483648
    %v1568 = vor.u32 1.1754944e-38, %v1567
    %v1569 = vsel %vm1566, %v1568, %v1564
    %v1570 = vmul.f32 1.0, %v1569
    %v1571 = vrcp.pop %v1175
    %v1572 = vmul.f32 %v1175, %v1571
    %v1573 = vsub.f32 1.0, %v1572
    %v1574 = vmul.f32 %v1571, %v1573
    %v1575 = vadd.f32 %v1571, %v1574
    %vm1576 = vweird.f32 %v1175
    %vm1577 = vweird.f32 %v1571
    %vm1578 = vmor %vm1576, %vm1577
    %v1579 = vsel %vm1578, %v1571, %v1575
    %v1580 = vand.u32 2147483647, %v1175
    %vm1581 = vcmp.eq.f32.partialorder %v1580, 8.507059e+37
    %v1582 = vand.u32 %v1175, 2147483648
    %v1583 = vor.u32 1.1754944e-38, %v1582
    %v1584 = vsel %vm1581, %v1583, %v1579
    %v1585 = vmul.f32 1.0, %v1584
    %v1586 = vrcp.pop %v1176
    %v1587 = vmul.f32 %v1176, %v1586
    %v1588 = vsub.f32 1.0, %v1587
    %v1589 = vmul.f32 %v1586, %v1588
    %v1590 = vadd.f32 %v1586, %v1589
    %vm1591 = vweird.f32 %v1176
    %vm1592 = vweird.f32 %v1586
    %vm1593 = vmor %vm1591, %vm1592
    %v1594 = vsel %vm1593, %v1586, %v1590
    %v1595 = vand.u32 2147483647, %v1176
    %vm1596 = vcmp.eq.f32.partialorder %v1595, 8.507059e+37
    %v1597 = vand.u32 %v1176, 2147483648
    %v1598 = vor.u32 1.1754944e-38, %v1597
    %v1599 = vsel %vm1596, %v1598, %v1594
    %v1600 = vmul.f32 1.0, %v1599
    %v1601 = vrcp.pop %v1177
    %v1602 = vmul.f32 %v1177, %v1601
    %v1603 = vsub.f32 1.0, %v1602
    %v1604 = vmul.f32 %v1601, %v1603
    %v1605 = vadd.f32 %v1601, %v1604
    %vm1606 = vweird.f32 %v1177
    %vm1607 = vweird.f32 %v1601
    %vm1608 = vmor %vm1606, %vm1607
    %v1609 = vsel %vm1608, %v1601, %v1605
    %v1610 = vand.u32 2147483647, %v1177
    %vm1611 = vcmp.eq.f32.partialorder %v1610, 8.507059e+37
    %v1612 = vand.u32 %v1177, 2147483648
    %v1613 = vor.u32 1.1754944e-38, %v1612
    %v1614 = vsel %vm1611, %v1613, %v1609
    %v1615 = vmul.f32 1.0, %v1614
    %v1616 = vrcp.pop %v1178
    %v1617 = vmul.f32 %v1178, %v1616
    %v1618 = vsub.f32 1.0, %v1617
    %v1619 = vmul.f32 %v1616, %v1618
    %v1620 = vadd.f32 %v1616, %v1619
    %vm1621 = vweird.f32 %v1178
    %vm1622 = vweird.f32 %v1616
    %vm1623 = vmor %vm1621, %vm1622
    %v1624 = vsel %vm1623, %v1616, %v1620
    %v1625 = vand.u32 2147483647, %v1178
    %vm1626 = vcmp.eq.f32.partialorder %v1625, 8.507059e+37
    %v1627 = vand.u32 %v1178, 2147483648
    %v1628 = vor.u32 1.1754944e-38, %v1627
    %v1629 = vsel %vm1626, %v1628, %v1624
    %v1630 = vmul.f32 1.0, %v1629
    %v1631 = vrcp.pop %v1179
    %v1632 = vmul.f32 %v1179, %v1631
    %v1633 = vsub.f32 1.0, %v1632
    %v1634 = vmul.f32 %v1631, %v1633
    %v1635 = vadd.f32 %v1631, %v1634
    %vm1636 = vweird.f32 %v1179
    %vm1637 = vweird.f32 %v1631
    %vm1638 = vmor %vm1636, %vm1637
    %v1639 = vsel %vm1638, %v1631, %v1635
    %v1640 = vand.u32 2147483647, %v1179
    %vm1641 = vcmp.eq.f32.partialorder %v1640, 8.507059e+37
    %v1642 = vand.u32 %v1179, 2147483648
    %v1643 = vor.u32 1.1754944e-38, %v1642
    %v1644 = vsel %vm1641, %v1643, %v1639
    %v1645 = vmul.f32 1.0, %v1644
    %v1646 = vrcp.pop %v1180
    %v1647 = vmul.f32 %v1180, %v1646
    %v1648 = vsub.f32 1.0, %v1647
    %v1649 = vmul.f32 %v1646, %v1648
    %v1650 = vadd.f32 %v1646, %v1649
    %vm1651 = vweird.f32 %v1180
    %vm1652 = vweird.f32 %v1646
    %vm1653 = vmor %vm1651, %vm1652
    %v1654 = vsel %vm1653, %v1646, %v1650
    %v1655 = vand.u32 2147483647, %v1180
    %vm1656 = vcmp.eq.f32.partialorder %v1655, 8.507059e+37
    %v1657 = vand.u32 %v1180, 2147483648
    %v1658 = vor.u32 1.1754944e-38, %v1657
    %v1659 = vsel %vm1656, %v1658, %v1654
    %v1660 = vmul.f32 1.0, %v1659
    %v1661 = vpack.c.bf16 %v1210, %v1195
    %v1662 = vpack.c.bf16 %v1240, %v1225
    %v1663 = vpack.c.bf16 %v1270, %v1255
    %v1664 = vpack.c.bf16 %v1300, %v1285
    %v1665 = vpack.c.bf16 %v1330, %v1315
    %v1666 = vpack.c.bf16 %v1360, %v1345
    %v1667 = vpack.c.bf16 %v1390, %v1375
    %v1668 = vpack.c.bf16 %v1420, %v1405
    %v1669 = vpack.c.bf16 %v1450, %v1435
    %v1670 = vpack.c.bf16 %v1480, %v1465
    %v1671 = vpack.c.bf16 %v1510, %v1495
    %v1672 = vpack.c.bf16 %v1540, %v1525
    %v1673 = vpack.c.bf16 %v1570, %v1555
    %v1674 = vpack.c.bf16 %v1600, %v1585
    %v1675 = vpack.c.bf16 %v1630, %v1615
    %v1676 = vpack.c.bf16 %v1660, %v1645
    %v1677 = vld [vmem:[%s6] sm:$0xf]
    %v1678 = vld [vmem:[%s6 + $0x4] sm:$0xf]
    %v1679 = vld [vmem:[%s6 + $0x8] sm:$0xf]
    %v1680 = vld [vmem:[%s6 + $0xc] sm:$0xf]
    %v1681 = vld [vmem:[%s6 + $0x10] sm:$0xf]
    %v1682 = vld [vmem:[%s6 + $0x14] sm:$0xf]
    %v1683 = vld [vmem:[%s6 + $0x18] sm:$0xf]
    %v1684 = vld [vmem:[%s6 + $0x1c] sm:$0xf]
    %v1685 = vld [vmem:[%s7] sm:$0x1]
    %v1687 = vperm.slane %v1685, 0
    %v1697 = vunpack.c.l.b16 %v1677
    %v1698 = vunpack.c.l.b16 %v1678
    %v1699 = vunpack.c.l.b16 %v1679
    %v1700 = vunpack.c.l.b16 %v1680
    %v1701 = vunpack.c.l.b16 %v1681
    %v1702 = vunpack.c.l.b16 %v1682
    %v1703 = vunpack.c.l.b16 %v1683
    %v1704 = vunpack.c.l.b16 %v1684
    %v1705 = vpack.c.b16 %v1698, %v1697
    %v1706 = vpack.c.b16 %v1700, %v1699
    %v1707 = vpack.c.b16 %v1702, %v1701
    %v1708 = vpack.c.b16 %v1704, %v1703
    %v1714 = vsel %vm931, %v1661, 0
    %v1717 = vsel %vm931, %v1662, 0
    %v1720 = vsel %vm931, %v1663, 0
    %v1723 = vsel %vm931, %v1664, 0
    %v1726 = vsel %vm931, %v1665, 0
    %v1729 = vsel %vm931, %v1666, 0
    %v1732 = vsel %vm931, %v1667, 0
    %v1735 = vsel %vm931, %v1668, 0
    %v1738 = vsel %vm931, %v1669, 0
    %v1741 = vsel %vm931, %v1670, 0
    %v1744 = vsel %vm931, %v1671, 0
    %v1747 = vsel %vm931, %v1672, 0
    %v1750 = vsel %vm931, %v1673, 0
    %v1753 = vsel %vm931, %v1674, 0
    %v1756 = vsel %vm931, %v1675, 0
    %v1759 = vsel %vm931, %v1676, 0
    %1761 = vmatpush.bf16.msra.mxu0 0
    %1762 = vmatpush.bf16.msra.mxu0 0
    %1763 = vmatpush.bf16.msra.mxu0 0
    %1764 = vmatpush.bf16.msra.mxu0 0
    %1765 = vmatpush.bf16.msra.mxu0 %v1708
    %1766 = vmatpush.bf16.msra.mxu0 %v1707
    %1767 = vmatpush.bf16.msra.mxu0 %v1706
    %1768 = vmatpush.bf16.msra.mxu0 %v1705
    %1769 = vmatmul.bf16.gmra.mxu0 %v1714
    %v1770 = vpop.f32.mrf.mxu0
    %v1771 = vadd.f32 %v1687, %v1770
    %v1772 = vpop.f32.mrf.mxu0
    %v1773 = vadd.f32 %v1687, %v1772
    %1774 = vmatmul.bf16.gmra.mxu0 %v1717
    %v1775 = vpop.f32.mrf.mxu0
    %v1776 = vadd.f32 %v1687, %v1775
    %v1777 = vpop.f32.mrf.mxu0
    %v1778 = vadd.f32 %v1687, %v1777
    %1779 = vmatmul.bf16.gmra.mxu0 %v1720
    %v1780 = vpop.f32.mrf.mxu0
    %v1781 = vadd.f32 %v1687, %v1780
    %v1782 = vpop.f32.mrf.mxu0
    %v1783 = vadd.f32 %v1687, %v1782
    %1784 = vmatmul.bf16.gmra.mxu0 %v1723
    %v1785 = vpop.f32.mrf.mxu0
    %v1786 = vadd.f32 %v1687, %v1785
    %v1787 = vpop.f32.mrf.mxu0
    %v1788 = vadd.f32 %v1687, %v1787
    %1789 = vmatmul.bf16.gmra.mxu0 %v1726
    %v1790 = vpop.f32.mrf.mxu0
    %v1791 = vadd.f32 %v1687, %v1790
    %v1792 = vpop.f32.mrf.mxu0
    %v1793 = vadd.f32 %v1687, %v1792
    %1794 = vmatmul.bf16.gmra.mxu0 %v1729
    %v1795 = vpop.f32.mrf.mxu0
    %v1796 = vadd.f32 %v1687, %v1795
    %v1797 = vpop.f32.mrf.mxu0
    %v1798 = vadd.f32 %v1687, %v1797
    %1799 = vmatmul.bf16.gmra.mxu0 %v1732
    %v1800 = vpop.f32.mrf.mxu0
    %v1801 = vadd.f32 %v1687, %v1800
    %v1802 = vpop.f32.mrf.mxu0
    %v1803 = vadd.f32 %v1687, %v1802
    %1804 = vmatmul.bf16.gmra.mxu0 %v1735
    %v1805 = vpop.f32.mrf.mxu0
    %v1806 = vadd.f32 %v1687, %v1805
    %v1807 = vpop.f32.mrf.mxu0
    %v1808 = vadd.f32 %v1687, %v1807
    %1809 = vmatmul.bf16.gmra.mxu0 %v1738
    %v1810 = vpop.f32.mrf.mxu0
    %v1811 = vadd.f32 %v1687, %v1810
    %v1812 = vpop.f32.mrf.mxu0
    %v1813 = vadd.f32 %v1687, %v1812
    %1814 = vmatmul.bf16.gmra.mxu0 %v1741
    %v1815 = vpop.f32.mrf.mxu0
    %v1816 = vadd.f32 %v1687, %v1815
    %v1817 = vpop.f32.mrf.mxu0
    %v1818 = vadd.f32 %v1687, %v1817
    %1819 = vmatmul.bf16.gmra.mxu0 %v1744
    %v1820 = vpop.f32.mrf.mxu0
    %v1821 = vadd.f32 %v1687, %v1820
    %v1822 = vpop.f32.mrf.mxu0
    %v1823 = vadd.f32 %v1687, %v1822
    %1824 = vmatmul.bf16.gmra.mxu0 %v1747
    %v1825 = vpop.f32.mrf.mxu0
    %v1826 = vadd.f32 %v1687, %v1825
    %v1827 = vpop.f32.mrf.mxu0
    %v1828 = vadd.f32 %v1687, %v1827
    %1829 = vmatmul.bf16.gmra.mxu0 %v1750
    %v1830 = vpop.f32.mrf.mxu0
    %v1831 = vadd.f32 %v1687, %v1830
    %v1832 = vpop.f32.mrf.mxu0
    %v1833 = vadd.f32 %v1687, %v1832
    %1834 = vmatmul.bf16.gmra.mxu0 %v1753
    %v1835 = vpop.f32.mrf.mxu0
    %v1836 = vadd.f32 %v1687, %v1835
    %v1837 = vpop.f32.mrf.mxu0
    %v1838 = vadd.f32 %v1687, %v1837
    %1839 = vmatmul.bf16.gmra.mxu0 %v1756
    %v1840 = vpop.f32.mrf.mxu0
    %v1841 = vadd.f32 %v1687, %v1840
    %v1842 = vpop.f32.mrf.mxu0
    %v1843 = vadd.f32 %v1687, %v1842
    %1844 = vmatmul.bf16.gmra.mxu0 %v1759
    %v1845 = vpop.f32.mrf.mxu0
    %v1846 = vadd.f32 %v1687, %v1845
    %v1847 = vpop.f32.mrf.mxu0
    %v1848 = vadd.f32 %v1687, %v1847
    %1849 = vdwg.mxu0
    %v1850 = vxor.u32 %v1771, 2147483648
    %v1851 = vxor.u32 %v1773, 2147483648
    %v1852 = vxor.u32 %v1776, 2147483648
    %v1853 = vxor.u32 %v1778, 2147483648
    %v1854 = vxor.u32 %v1781, 2147483648
    %v1855 = vxor.u32 %v1783, 2147483648
    %v1856 = vxor.u32 %v1786, 2147483648
    %v1857 = vxor.u32 %v1788, 2147483648
    %v1858 = vxor.u32 %v1791, 2147483648
    %v1859 = vxor.u32 %v1793, 2147483648
    %v1860 = vxor.u32 %v1796, 2147483648
    %v1861 = vxor.u32 %v1798, 2147483648
    %v1862 = vxor.u32 %v1801, 2147483648
    %v1863 = vxor.u32 %v1803, 2147483648
    %v1864 = vxor.u32 %v1806, 2147483648
    %v1865 = vxor.u32 %v1808, 2147483648
    %v1866 = vxor.u32 %v1811, 2147483648
    %v1867 = vxor.u32 %v1813, 2147483648
    %v1868 = vxor.u32 %v1816, 2147483648
    %v1869 = vxor.u32 %v1818, 2147483648
    %v1870 = vxor.u32 %v1821, 2147483648
    %v1871 = vxor.u32 %v1823, 2147483648
    %v1872 = vxor.u32 %v1826, 2147483648
    %v1873 = vxor.u32 %v1828, 2147483648
    %v1874 = vxor.u32 %v1831, 2147483648
    %v1875 = vxor.u32 %v1833, 2147483648
    %v1876 = vxor.u32 %v1836, 2147483648
    %v1877 = vxor.u32 %v1838, 2147483648
    %v1878 = vxor.u32 %v1841, 2147483648
    %v1879 = vxor.u32 %v1843, 2147483648
    %v1880 = vxor.u32 %v1846, 2147483648
    %v1881 = vxor.u32 %v1848, 2147483648
    %v1882 = vmul.f32 %v1850, 1.442695
    %v1883 = vpow.pop %v1882
    %v1884 = vmul.f32 %v1851, 1.442695
    %v1885 = vpow.pop %v1884
    %v1886 = vmul.f32 %v1852, 1.442695
    %v1887 = vpow.pop %v1886
    %v1888 = vmul.f32 %v1853, 1.442695
    %v1889 = vpow.pop %v1888
    %v1890 = vmul.f32 %v1854, 1.442695
    %v1891 = vpow.pop %v1890
    %v1892 = vmul.f32 %v1855, 1.442695
    %v1893 = vpow.pop %v1892
    %v1894 = vmul.f32 %v1856, 1.442695
    %v1895 = vpow.pop %v1894
    %v1896 = vmul.f32 %v1857, 1.442695
    %v1897 = vpow.pop %v1896
    %v1898 = vmul.f32 %v1858, 1.442695
    %v1899 = vpow.pop %v1898
    %v1900 = vmul.f32 %v1859, 1.442695
    %v1901 = vpow.pop %v1900
    %v1902 = vmul.f32 %v1860, 1.442695
    %v1903 = vpow.pop %v1902
    %v1904 = vmul.f32 %v1861, 1.442695
    %v1905 = vpow.pop %v1904
    %v1906 = vmul.f32 %v1862, 1.442695
    %v1907 = vpow.pop %v1906
    %v1908 = vmul.f32 %v1863, 1.442695
    %v1909 = vpow.pop %v1908
    %v1910 = vmul.f32 %v1864, 1.442695
    %v1911 = vpow.pop %v1910
    %v1912 = vmul.f32 %v1865, 1.442695
    %v1913 = vpow.pop %v1912
    %v1914 = vmul.f32 %v1866, 1.442695
    %v1915 = vpow.pop %v1914
    %v1916 = vmul.f32 %v1867, 1.442695
    %v1917 = vpow.pop %v1916
    %v1918 = vmul.f32 %v1868, 1.442695
    %v1919 = vpow.pop %v1918
    %v1920 = vmul.f32 %v1869, 1.442695
    %v1921 = vpow.pop %v1920
    %v1922 = vmul.f32 %v1870, 1.442695
    %v1923 = vpow.pop %v1922
    %v1924 = vmul.f32 %v1871, 1.442695
    %v1925 = vpow.pop %v1924
    %v1926 = vmul.f32 %v1872, 1.442695
    %v1927 = vpow.pop %v1926
    %v1928 = vmul.f32 %v1873, 1.442695
    %v1929 = vpow.pop %v1928
    %v1930 = vmul.f32 %v1874, 1.442695
    %v1931 = vpow.pop %v1930
    %v1932 = vmul.f32 %v1875, 1.442695
    %v1933 = vpow.pop %v1932
    %v1934 = vmul.f32 %v1876, 1.442695
    %v1935 = vpow.pop %v1934
    %v1936 = vmul.f32 %v1877, 1.442695
    %v1937 = vpow.pop %v1936
    %v1938 = vmul.f32 %v1878, 1.442695
    %v1939 = vpow.pop %v1938
    %v1940 = vmul.f32 %v1879, 1.442695
    %v1941 = vpow.pop %v1940
    %v1942 = vmul.f32 %v1880, 1.442695
    %v1943 = vpow.pop %v1942
    %v1944 = vmul.f32 %v1881, 1.442695
    %v1945 = vpow.pop %v1944
    %v1946 = vadd.f32 %v1883, 1.0
    %v1947 = vadd.f32 %v1885, 1.0
    %v1948 = vadd.f32 %v1887, 1.0
    %v1949 = vadd.f32 %v1889, 1.0
    %v1950 = vadd.f32 %v1891, 1.0
    %v1951 = vadd.f32 %v1893, 1.0
    %v1952 = vadd.f32 %v1895, 1.0
    %v1953 = vadd.f32 %v1897, 1.0
    %v1954 = vadd.f32 %v1899, 1.0
    %v1955 = vadd.f32 %v1901, 1.0
    %v1956 = vadd.f32 %v1903, 1.0
    %v1957 = vadd.f32 %v1905, 1.0
    %v1958 = vadd.f32 %v1907, 1.0
    %v1959 = vadd.f32 %v1909, 1.0
    %v1960 = vadd.f32 %v1911, 1.0
    %v1961 = vadd.f32 %v1913, 1.0
    %v1962 = vadd.f32 %v1915, 1.0
    %v1963 = vadd.f32 %v1917, 1.0
    %v1964 = vadd.f32 %v1919, 1.0
    %v1965 = vadd.f32 %v1921, 1.0
    %v1966 = vadd.f32 %v1923, 1.0
    %v1967 = vadd.f32 %v1925, 1.0
    %v1968 = vadd.f32 %v1927, 1.0
    %v1969 = vadd.f32 %v1929, 1.0
    %v1970 = vadd.f32 %v1931, 1.0
    %v1971 = vadd.f32 %v1933, 1.0
    %v1972 = vadd.f32 %v1935, 1.0
    %v1973 = vadd.f32 %v1937, 1.0
    %v1974 = vadd.f32 %v1939, 1.0
    %v1975 = vadd.f32 %v1941, 1.0
    %v1976 = vadd.f32 %v1943, 1.0
    %v1977 = vadd.f32 %v1945, 1.0
    %v1978 = vrcp.pop %v1946
    %v1979 = vmul.f32 %v1946, %v1978
    %v1980 = vsub.f32 1.0, %v1979
    %v1981 = vmul.f32 %v1978, %v1980
    %v1982 = vadd.f32 %v1978, %v1981
    %vm1983 = vweird.f32 %v1946
    %vm1984 = vweird.f32 %v1978
    %vm1985 = vmor %vm1983, %vm1984
    %v1986 = vsel %vm1985, %v1978, %v1982
    %v1987 = vand.u32 2147483647, %v1946
    %vm1988 = vcmp.eq.f32.partialorder %v1987, 8.507059e+37
    %v1989 = vand.u32 %v1946, 2147483648
    %v1990 = vor.u32 1.1754944e-38, %v1989
    %v1991 = vsel %vm1988, %v1990, %v1986
    %v1992 = vmul.f32 1.0, %v1991
    %v1993 = vrcp.pop %v1947
    %v1994 = vmul.f32 %v1947, %v1993
    %v1995 = vsub.f32 1.0, %v1994
    %v1996 = vmul.f32 %v1993, %v1995
    %v1997 = vadd.f32 %v1993, %v1996
    %vm1998 = vweird.f32 %v1947
    %vm1999 = vweird.f32 %v1993
    %vm2000 = vmor %vm1998, %vm1999
    %v2001 = vsel %vm2000, %v1993, %v1997
    %v2002 = vand.u32 2147483647, %v1947
    %vm2003 = vcmp.eq.f32.partialorder %v2002, 8.507059e+37
    %v2004 = vand.u32 %v1947, 2147483648
    %v2005 = vor.u32 1.1754944e-38, %v2004
    %v2006 = vsel %vm2003, %v2005, %v2001
    %v2007 = vmul.f32 1.0, %v2006
    %v2008 = vrcp.pop %v1948
    %v2009 = vmul.f32 %v1948, %v2008
    %v2010 = vsub.f32 1.0, %v2009
    %v2011 = vmul.f32 %v2008, %v2010
    %v2012 = vadd.f32 %v2008, %v2011
    %vm2013 = vweird.f32 %v1948
    %vm2014 = vweird.f32 %v2008
    %vm2015 = vmor %vm2013, %vm2014
    %v2016 = vsel %vm2015, %v2008, %v2012
    %v2017 = vand.u32 2147483647, %v1948
    %vm2018 = vcmp.eq.f32.partialorder %v2017, 8.507059e+37
    %v2019 = vand.u32 %v1948, 2147483648
    %v2020 = vor.u32 1.1754944e-38, %v2019
    %v2021 = vsel %vm2018, %v2020, %v2016
    %v2022 = vmul.f32 1.0, %v2021
    %v2023 = vrcp.pop %v1949
    %v2024 = vmul.f32 %v1949, %v2023
    %v2025 = vsub.f32 1.0, %v2024
    %v2026 = vmul.f32 %v2023, %v2025
    %v2027 = vadd.f32 %v2023, %v2026
    %vm2028 = vweird.f32 %v1949
    %vm2029 = vweird.f32 %v2023
    %vm2030 = vmor %vm2028, %vm2029
    %v2031 = vsel %vm2030, %v2023, %v2027
    %v2032 = vand.u32 2147483647, %v1949
    %vm2033 = vcmp.eq.f32.partialorder %v2032, 8.507059e+37
    %v2034 = vand.u32 %v1949, 2147483648
    %v2035 = vor.u32 1.1754944e-38, %v2034
    %v2036 = vsel %vm2033, %v2035, %v2031
    %v2037 = vmul.f32 1.0, %v2036
    %v2038 = vrcp.pop %v1950
    %v2039 = vmul.f32 %v1950, %v2038
    %v2040 = vsub.f32 1.0, %v2039
    %v2041 = vmul.f32 %v2038, %v2040
    %v2042 = vadd.f32 %v2038, %v2041
    %vm2043 = vweird.f32 %v1950
    %vm2044 = vweird.f32 %v2038
    %vm2045 = vmor %vm2043, %vm2044
    %v2046 = vsel %vm2045, %v2038, %v2042
    %v2047 = vand.u32 2147483647, %v1950
    %vm2048 = vcmp.eq.f32.partialorder %v2047, 8.507059e+37
    %v2049 = vand.u32 %v1950, 2147483648
    %v2050 = vor.u32 1.1754944e-38, %v2049
    %v2051 = vsel %vm2048, %v2050, %v2046
    %v2052 = vmul.f32 1.0, %v2051
    %v2053 = vrcp.pop %v1951
    %v2054 = vmul.f32 %v1951, %v2053
    %v2055 = vsub.f32 1.0, %v2054
    %v2056 = vmul.f32 %v2053, %v2055
    %v2057 = vadd.f32 %v2053, %v2056
    %vm2058 = vweird.f32 %v1951
    %vm2059 = vweird.f32 %v2053
    %vm2060 = vmor %vm2058, %vm2059
    %v2061 = vsel %vm2060, %v2053, %v2057
    %v2062 = vand.u32 2147483647, %v1951
    %vm2063 = vcmp.eq.f32.partialorder %v2062, 8.507059e+37
    %v2064 = vand.u32 %v1951, 2147483648
    %v2065 = vor.u32 1.1754944e-38, %v2064
    %v2066 = vsel %vm2063, %v2065, %v2061
    %v2067 = vmul.f32 1.0, %v2066
    %v2068 = vrcp.pop %v1952
    %v2069 = vmul.f32 %v1952, %v2068
    %v2070 = vsub.f32 1.0, %v2069
    %v2071 = vmul.f32 %v2068, %v2070
    %v2072 = vadd.f32 %v2068, %v2071
    %vm2073 = vweird.f32 %v1952
    %vm2074 = vweird.f32 %v2068
    %vm2075 = vmor %vm2073, %vm2074
    %v2076 = vsel %vm2075, %v2068, %v2072
    %v2077 = vand.u32 2147483647, %v1952
    %vm2078 = vcmp.eq.f32.partialorder %v2077, 8.507059e+37
    %v2079 = vand.u32 %v1952, 2147483648
    %v2080 = vor.u32 1.1754944e-38, %v2079
    %v2081 = vsel %vm2078, %v2080, %v2076
    %v2082 = vmul.f32 1.0, %v2081
    %v2083 = vrcp.pop %v1953
    %v2084 = vmul.f32 %v1953, %v2083
    %v2085 = vsub.f32 1.0, %v2084
    %v2086 = vmul.f32 %v2083, %v2085
    %v2087 = vadd.f32 %v2083, %v2086
    %vm2088 = vweird.f32 %v1953
    %vm2089 = vweird.f32 %v2083
    %vm2090 = vmor %vm2088, %vm2089
    %v2091 = vsel %vm2090, %v2083, %v2087
    %v2092 = vand.u32 2147483647, %v1953
    %vm2093 = vcmp.eq.f32.partialorder %v2092, 8.507059e+37
    %v2094 = vand.u32 %v1953, 2147483648
    %v2095 = vor.u32 1.1754944e-38, %v2094
    %v2096 = vsel %vm2093, %v2095, %v2091
    %v2097 = vmul.f32 1.0, %v2096
    %v2098 = vrcp.pop %v1954
    %v2099 = vmul.f32 %v1954, %v2098
    %v2100 = vsub.f32 1.0, %v2099
    %v2101 = vmul.f32 %v2098, %v2100
    %v2102 = vadd.f32 %v2098, %v2101
    %vm2103 = vweird.f32 %v1954
    %vm2104 = vweird.f32 %v2098
    %vm2105 = vmor %vm2103, %vm2104
    %v2106 = vsel %vm2105, %v2098, %v2102
    %v2107 = vand.u32 2147483647, %v1954
    %vm2108 = vcmp.eq.f32.partialorder %v2107, 8.507059e+37
    %v2109 = vand.u32 %v1954, 2147483648
    %v2110 = vor.u32 1.1754944e-38, %v2109
    %v2111 = vsel %vm2108, %v2110, %v2106
    %v2112 = vmul.f32 1.0, %v2111
    %v2113 = vrcp.pop %v1955
    %v2114 = vmul.f32 %v1955, %v2113
    %v2115 = vsub.f32 1.0, %v2114
    %v2116 = vmul.f32 %v2113, %v2115
    %v2117 = vadd.f32 %v2113, %v2116
    %vm2118 = vweird.f32 %v1955
    %vm2119 = vweird.f32 %v2113
    %vm2120 = vmor %vm2118, %vm2119
    %v2121 = vsel %vm2120, %v2113, %v2117
    %v2122 = vand.u32 2147483647, %v1955
    %vm2123 = vcmp.eq.f32.partialorder %v2122, 8.507059e+37
    %v2124 = vand.u32 %v1955, 2147483648
    %v2125 = vor.u32 1.1754944e-38, %v2124
    %v2126 = vsel %vm2123, %v2125, %v2121
    %v2127 = vmul.f32 1.0, %v2126
    %v2128 = vrcp.pop %v1956
    %v2129 = vmul.f32 %v1956, %v2128
    %v2130 = vsub.f32 1.0, %v2129
    %v2131 = vmul.f32 %v2128, %v2130
    %v2132 = vadd.f32 %v2128, %v2131
    %vm2133 = vweird.f32 %v1956
    %vm2134 = vweird.f32 %v2128
    %vm2135 = vmor %vm2133, %vm2134
    %v2136 = vsel %vm2135, %v2128, %v2132
    %v2137 = vand.u32 2147483647, %v1956
    %vm2138 = vcmp.eq.f32.partialorder %v2137, 8.507059e+37
    %v2139 = vand.u32 %v1956, 2147483648
    %v2140 = vor.u32 1.1754944e-38, %v2139
    %v2141 = vsel %vm2138, %v2140, %v2136
    %v2142 = vmul.f32 1.0, %v2141
    %v2143 = vrcp.pop %v1957
    %v2144 = vmul.f32 %v1957, %v2143
    %v2145 = vsub.f32 1.0, %v2144
    %v2146 = vmul.f32 %v2143, %v2145
    %v2147 = vadd.f32 %v2143, %v2146
    %vm2148 = vweird.f32 %v1957
    %vm2149 = vweird.f32 %v2143
    %vm2150 = vmor %vm2148, %vm2149
    %v2151 = vsel %vm2150, %v2143, %v2147
    %v2152 = vand.u32 2147483647, %v1957
    %vm2153 = vcmp.eq.f32.partialorder %v2152, 8.507059e+37
    %v2154 = vand.u32 %v1957, 2147483648
    %v2155 = vor.u32 1.1754944e-38, %v2154
    %v2156 = vsel %vm2153, %v2155, %v2151
    %v2157 = vmul.f32 1.0, %v2156
    %v2158 = vrcp.pop %v1958
    %v2159 = vmul.f32 %v1958, %v2158
    %v2160 = vsub.f32 1.0, %v2159
    %v2161 = vmul.f32 %v2158, %v2160
    %v2162 = vadd.f32 %v2158, %v2161
    %vm2163 = vweird.f32 %v1958
    %vm2164 = vweird.f32 %v2158
    %vm2165 = vmor %vm2163, %vm2164
    %v2166 = vsel %vm2165, %v2158, %v2162
    %v2167 = vand.u32 2147483647, %v1958
    %vm2168 = vcmp.eq.f32.partialorder %v2167, 8.507059e+37
    %v2169 = vand.u32 %v1958, 2147483648
    %v2170 = vor.u32 1.1754944e-38, %v2169
    %v2171 = vsel %vm2168, %v2170, %v2166
    %v2172 = vmul.f32 1.0, %v2171
    %v2173 = vrcp.pop %v1959
    %v2174 = vmul.f32 %v1959, %v2173
    %v2175 = vsub.f32 1.0, %v2174
    %v2176 = vmul.f32 %v2173, %v2175
    %v2177 = vadd.f32 %v2173, %v2176
    %vm2178 = vweird.f32 %v1959
    %vm2179 = vweird.f32 %v2173
    %vm2180 = vmor %vm2178, %vm2179
    %v2181 = vsel %vm2180, %v2173, %v2177
    %v2182 = vand.u32 2147483647, %v1959
    %vm2183 = vcmp.eq.f32.partialorder %v2182, 8.507059e+37
    %v2184 = vand.u32 %v1959, 2147483648
    %v2185 = vor.u32 1.1754944e-38, %v2184
    %v2186 = vsel %vm2183, %v2185, %v2181
    %v2187 = vmul.f32 1.0, %v2186
    %v2188 = vrcp.pop %v1960
    %v2189 = vmul.f32 %v1960, %v2188
    %v2190 = vsub.f32 1.0, %v2189
    %v2191 = vmul.f32 %v2188, %v2190
    %v2192 = vadd.f32 %v2188, %v2191
    %vm2193 = vweird.f32 %v1960
    %vm2194 = vweird.f32 %v2188
    %vm2195 = vmor %vm2193, %vm2194
    %v2196 = vsel %vm2195, %v2188, %v2192
    %v2197 = vand.u32 2147483647, %v1960
    %vm2198 = vcmp.eq.f32.partialorder %v2197, 8.507059e+37
    %v2199 = vand.u32 %v1960, 2147483648
    %v2200 = vor.u32 1.1754944e-38, %v2199
    %v2201 = vsel %vm2198, %v2200, %v2196
    %v2202 = vmul.f32 1.0, %v2201
    %v2203 = vrcp.pop %v1961
    %v2204 = vmul.f32 %v1961, %v2203
    %v2205 = vsub.f32 1.0, %v2204
    %v2206 = vmul.f32 %v2203, %v2205
    %v2207 = vadd.f32 %v2203, %v2206
    %vm2208 = vweird.f32 %v1961
    %vm2209 = vweird.f32 %v2203
    %vm2210 = vmor %vm2208, %vm2209
    %v2211 = vsel %vm2210, %v2203, %v2207
    %v2212 = vand.u32 2147483647, %v1961
    %vm2213 = vcmp.eq.f32.partialorder %v2212, 8.507059e+37
    %v2214 = vand.u32 %v1961, 2147483648
    %v2215 = vor.u32 1.1754944e-38, %v2214
    %v2216 = vsel %vm2213, %v2215, %v2211
    %v2217 = vmul.f32 1.0, %v2216
    %v2218 = vrcp.pop %v1962
    %v2219 = vmul.f32 %v1962, %v2218
    %v2220 = vsub.f32 1.0, %v2219
    %v2221 = vmul.f32 %v2218, %v2220
    %v2222 = vadd.f32 %v2218, %v2221
    %vm2223 = vweird.f32 %v1962
    %vm2224 = vweird.f32 %v2218
    %vm2225 = vmor %vm2223, %vm2224
    %v2226 = vsel %vm2225, %v2218, %v2222
    %v2227 = vand.u32 2147483647, %v1962
    %vm2228 = vcmp.eq.f32.partialorder %v2227, 8.507059e+37
    %v2229 = vand.u32 %v1962, 2147483648
    %v2230 = vor.u32 1.1754944e-38, %v2229
    %v2231 = vsel %vm2228, %v2230, %v2226
    %v2232 = vmul.f32 1.0, %v2231
    %v2233 = vrcp.pop %v1963
    %v2234 = vmul.f32 %v1963, %v2233
    %v2235 = vsub.f32 1.0, %v2234
    %v2236 = vmul.f32 %v2233, %v2235
    %v2237 = vadd.f32 %v2233, %v2236
    %vm2238 = vweird.f32 %v1963
    %vm2239 = vweird.f32 %v2233
    %vm2240 = vmor %vm2238, %vm2239
    %v2241 = vsel %vm2240, %v2233, %v2237
    %v2242 = vand.u32 2147483647, %v1963
    %vm2243 = vcmp.eq.f32.partialorder %v2242, 8.507059e+37
    %v2244 = vand.u32 %v1963, 2147483648
    %v2245 = vor.u32 1.1754944e-38, %v2244
    %v2246 = vsel %vm2243, %v2245, %v2241
    %v2247 = vmul.f32 1.0, %v2246
    %v2248 = vrcp.pop %v1964
    %v2249 = vmul.f32 %v1964, %v2248
    %v2250 = vsub.f32 1.0, %v2249
    %v2251 = vmul.f32 %v2248, %v2250
    %v2252 = vadd.f32 %v2248, %v2251
    %vm2253 = vweird.f32 %v1964
    %vm2254 = vweird.f32 %v2248
    %vm2255 = vmor %vm2253, %vm2254
    %v2256 = vsel %vm2255, %v2248, %v2252
    %v2257 = vand.u32 2147483647, %v1964
    %vm2258 = vcmp.eq.f32.partialorder %v2257, 8.507059e+37
    %v2259 = vand.u32 %v1964, 2147483648
    %v2260 = vor.u32 1.1754944e-38, %v2259
    %v2261 = vsel %vm2258, %v2260, %v2256
    %v2262 = vmul.f32 1.0, %v2261
    %v2263 = vrcp.pop %v1965
    %v2264 = vmul.f32 %v1965, %v2263
    %v2265 = vsub.f32 1.0, %v2264
    %v2266 = vmul.f32 %v2263, %v2265
    %v2267 = vadd.f32 %v2263, %v2266
    %vm2268 = vweird.f32 %v1965
    %vm2269 = vweird.f32 %v2263
    %vm2270 = vmor %vm2268, %vm2269
    %v2271 = vsel %vm2270, %v2263, %v2267
    %v2272 = vand.u32 2147483647, %v1965
    %vm2273 = vcmp.eq.f32.partialorder %v2272, 8.507059e+37
    %v2274 = vand.u32 %v1965, 2147483648
    %v2275 = vor.u32 1.1754944e-38, %v2274
    %v2276 = vsel %vm2273, %v2275, %v2271
    %v2277 = vmul.f32 1.0, %v2276
    %v2278 = vrcp.pop %v1966
    %v2279 = vmul.f32 %v1966, %v2278
    %v2280 = vsub.f32 1.0, %v2279
    %v2281 = vmul.f32 %v2278, %v2280
    %v2282 = vadd.f32 %v2278, %v2281
    %vm2283 = vweird.f32 %v1966
    %vm2284 = vweird.f32 %v2278
    %vm2285 = vmor %vm2283, %vm2284
    %v2286 = vsel %vm2285, %v2278, %v2282
    %v2287 = vand.u32 2147483647, %v1966
    %vm2288 = vcmp.eq.f32.partialorder %v2287, 8.507059e+37
    %v2289 = vand.u32 %v1966, 2147483648
    %v2290 = vor.u32 1.1754944e-38, %v2289
    %v2291 = vsel %vm2288, %v2290, %v2286
    %v2292 = vmul.f32 1.0, %v2291
    %v2293 = vrcp.pop %v1967
    %v2294 = vmul.f32 %v1967, %v2293
    %v2295 = vsub.f32 1.0, %v2294
    %v2296 = vmul.f32 %v2293, %v2295
    %v2297 = vadd.f32 %v2293, %v2296
    %vm2298 = vweird.f32 %v1967
    %vm2299 = vweird.f32 %v2293
    %vm2300 = vmor %vm2298, %vm2299
    %v2301 = vsel %vm2300, %v2293, %v2297
    %v2302 = vand.u32 2147483647, %v1967
    %vm2303 = vcmp.eq.f32.partialorder %v2302, 8.507059e+37
    %v2304 = vand.u32 %v1967, 2147483648
    %v2305 = vor.u32 1.1754944e-38, %v2304
    %v2306 = vsel %vm2303, %v2305, %v2301
    %v2307 = vmul.f32 1.0, %v2306
    %v2308 = vrcp.pop %v1968
    %v2309 = vmul.f32 %v1968, %v2308
    %v2310 = vsub.f32 1.0, %v2309
    %v2311 = vmul.f32 %v2308, %v2310
    %v2312 = vadd.f32 %v2308, %v2311
    %vm2313 = vweird.f32 %v1968
    %vm2314 = vweird.f32 %v2308
    %vm2315 = vmor %vm2313, %vm2314
    %v2316 = vsel %vm2315, %v2308, %v2312
    %v2317 = vand.u32 2147483647, %v1968
    %vm2318 = vcmp.eq.f32.partialorder %v2317, 8.507059e+37
    %v2319 = vand.u32 %v1968, 2147483648
    %v2320 = vor.u32 1.1754944e-38, %v2319
    %v2321 = vsel %vm2318, %v2320, %v2316
    %v2322 = vmul.f32 1.0, %v2321
    %v2323 = vrcp.pop %v1969
    %v2324 = vmul.f32 %v1969, %v2323
    %v2325 = vsub.f32 1.0, %v2324
    %v2326 = vmul.f32 %v2323, %v2325
    %v2327 = vadd.f32 %v2323, %v2326
    %vm2328 = vweird.f32 %v1969
    %vm2329 = vweird.f32 %v2323
    %vm2330 = vmor %vm2328, %vm2329
    %v2331 = vsel %vm2330, %v2323, %v2327
    %v2332 = vand.u32 2147483647, %v1969
    %vm2333 = vcmp.eq.f32.partialorder %v2332, 8.507059e+37
    %v2334 = vand.u32 %v1969, 2147483648
    %v2335 = vor.u32 1.1754944e-38, %v2334
    %v2336 = vsel %vm2333, %v2335, %v2331
    %v2337 = vmul.f32 1.0, %v2336
    %v2338 = vrcp.pop %v1970
    %v2339 = vmul.f32 %v1970, %v2338
    %v2340 = vsub.f32 1.0, %v2339
    %v2341 = vmul.f32 %v2338, %v2340
    %v2342 = vadd.f32 %v2338, %v2341
    %vm2343 = vweird.f32 %v1970
    %vm2344 = vweird.f32 %v2338
    %vm2345 = vmor %vm2343, %vm2344
    %v2346 = vsel %vm2345, %v2338, %v2342
    %v2347 = vand.u32 2147483647, %v1970
    %vm2348 = vcmp.eq.f32.partialorder %v2347, 8.507059e+37
    %v2349 = vand.u32 %v1970, 2147483648
    %v2350 = vor.u32 1.1754944e-38, %v2349
    %v2351 = vsel %vm2348, %v2350, %v2346
    %v2352 = vmul.f32 1.0, %v2351
    %v2353 = vrcp.pop %v1971
    %v2354 = vmul.f32 %v1971, %v2353
    %v2355 = vsub.f32 1.0, %v2354
    %v2356 = vmul.f32 %v2353, %v2355
    %v2357 = vadd.f32 %v2353, %v2356
    %vm2358 = vweird.f32 %v1971
    %vm2359 = vweird.f32 %v2353
    %vm2360 = vmor %vm2358, %vm2359
    %v2361 = vsel %vm2360, %v2353, %v2357
    %v2362 = vand.u32 2147483647, %v1971
    %vm2363 = vcmp.eq.f32.partialorder %v2362, 8.507059e+37
    %v2364 = vand.u32 %v1971, 2147483648
    %v2365 = vor.u32 1.1754944e-38, %v2364
    %v2366 = vsel %vm2363, %v2365, %v2361
    %v2367 = vmul.f32 1.0, %v2366
    %v2368 = vrcp.pop %v1972
    %v2369 = vmul.f32 %v1972, %v2368
    %v2370 = vsub.f32 1.0, %v2369
    %v2371 = vmul.f32 %v2368, %v2370
    %v2372 = vadd.f32 %v2368, %v2371
    %vm2373 = vweird.f32 %v1972
    %vm2374 = vweird.f32 %v2368
    %vm2375 = vmor %vm2373, %vm2374
    %v2376 = vsel %vm2375, %v2368, %v2372
    %v2377 = vand.u32 2147483647, %v1972
    %vm2378 = vcmp.eq.f32.partialorder %v2377, 8.507059e+37
    %v2379 = vand.u32 %v1972, 2147483648
    %v2380 = vor.u32 1.1754944e-38, %v2379
    %v2381 = vsel %vm2378, %v2380, %v2376
    %v2382 = vmul.f32 1.0, %v2381
    %v2383 = vrcp.pop %v1973
    %v2384 = vmul.f32 %v1973, %v2383
    %v2385 = vsub.f32 1.0, %v2384
    %v2386 = vmul.f32 %v2383, %v2385
    %v2387 = vadd.f32 %v2383, %v2386
    %vm2388 = vweird.f32 %v1973
    %vm2389 = vweird.f32 %v2383
    %vm2390 = vmor %vm2388, %vm2389
    %v2391 = vsel %vm2390, %v2383, %v2387
    %v2392 = vand.u32 2147483647, %v1973
    %vm2393 = vcmp.eq.f32.partialorder %v2392, 8.507059e+37
    %v2394 = vand.u32 %v1973, 2147483648
    %v2395 = vor.u32 1.1754944e-38, %v2394
    %v2396 = vsel %vm2393, %v2395, %v2391
    %v2397 = vmul.f32 1.0, %v2396
    %v2398 = vrcp.pop %v1974
    %v2399 = vmul.f32 %v1974, %v2398
    %v2400 = vsub.f32 1.0, %v2399
    %v2401 = vmul.f32 %v2398, %v2400
    %v2402 = vadd.f32 %v2398, %v2401
    %vm2403 = vweird.f32 %v1974
    %vm2404 = vweird.f32 %v2398
    %vm2405 = vmor %vm2403, %vm2404
    %v2406 = vsel %vm2405, %v2398, %v2402
    %v2407 = vand.u32 2147483647, %v1974
    %vm2408 = vcmp.eq.f32.partialorder %v2407, 8.507059e+37
    %v2409 = vand.u32 %v1974, 2147483648
    %v2410 = vor.u32 1.1754944e-38, %v2409
    %v2411 = vsel %vm2408, %v2410, %v2406
    %v2412 = vmul.f32 1.0, %v2411
    %v2413 = vrcp.pop %v1975
    %v2414 = vmul.f32 %v1975, %v2413
    %v2415 = vsub.f32 1.0, %v2414
    %v2416 = vmul.f32 %v2413, %v2415
    %v2417 = vadd.f32 %v2413, %v2416
    %vm2418 = vweird.f32 %v1975
    %vm2419 = vweird.f32 %v2413
    %vm2420 = vmor %vm2418, %vm2419
    %v2421 = vsel %vm2420, %v2413, %v2417
    %v2422 = vand.u32 2147483647, %v1975
    %vm2423 = vcmp.eq.f32.partialorder %v2422, 8.507059e+37
    %v2424 = vand.u32 %v1975, 2147483648
    %v2425 = vor.u32 1.1754944e-38, %v2424
    %v2426 = vsel %vm2423, %v2425, %v2421
    %v2427 = vmul.f32 1.0, %v2426
    %v2428 = vrcp.pop %v1976
    %v2429 = vmul.f32 %v1976, %v2428
    %v2430 = vsub.f32 1.0, %v2429
    %v2431 = vmul.f32 %v2428, %v2430
    %v2432 = vadd.f32 %v2428, %v2431
    %vm2433 = vweird.f32 %v1976
    %vm2434 = vweird.f32 %v2428
    %vm2435 = vmor %vm2433, %vm2434
    %v2436 = vsel %vm2435, %v2428, %v2432
    %v2437 = vand.u32 2147483647, %v1976
    %vm2438 = vcmp.eq.f32.partialorder %v2437, 8.507059e+37
    %v2439 = vand.u32 %v1976, 2147483648
    %v2440 = vor.u32 1.1754944e-38, %v2439
    %v2441 = vsel %vm2438, %v2440, %v2436
    %v2442 = vmul.f32 1.0, %v2441
    %v2443 = vrcp.pop %v1977
    %v2444 = vmul.f32 %v1977, %v2443
    %v2445 = vsub.f32 1.0, %v2444
    %v2446 = vmul.f32 %v2443, %v2445
    %v2447 = vadd.f32 %v2443, %v2446
    %vm2448 = vweird.f32 %v1977
    %vm2449 = vweird.f32 %v2443
    %vm2450 = vmor %vm2448, %vm2449
    %v2451 = vsel %vm2450, %v2443, %v2447
    %v2452 = vand.u32 2147483647, %v1977
    %vm2453 = vcmp.eq.f32.partialorder %v2452, 8.507059e+37
    %v2454 = vand.u32 %v1977, 2147483648
    %v2455 = vor.u32 1.1754944e-38, %v2454
    %v2456 = vsel %vm2453, %v2455, %v2451
    %v2457 = vmul.f32 1.0, %v2456
    %v2458 = vld [vmem:[%s8] sm:$0x1]
    %v2460 = vperm.slane %v2458, 0
    %v2462 = vmul.f32 %v1992, %v2460
    %v2463 = vmul.f32 %v2007, %v2460
    %v2464 = vmul.f32 %v2022, %v2460
    %v2465 = vmul.f32 %v2037, %v2460
    %v2466 = vmul.f32 %v2052, %v2460
    %v2467 = vmul.f32 %v2067, %v2460
    %v2468 = vmul.f32 %v2082, %v2460
    %v2469 = vmul.f32 %v2097, %v2460
    %v2470 = vmul.f32 %v2112, %v2460
    %v2471 = vmul.f32 %v2127, %v2460
    %v2472 = vmul.f32 %v2142, %v2460
    %v2473 = vmul.f32 %v2157, %v2460
    %v2474 = vmul.f32 %v2172, %v2460
    %v2475 = vmul.f32 %v2187, %v2460
    %v2476 = vmul.f32 %v2202, %v2460
    %v2477 = vmul.f32 %v2217, %v2460
    %v2478 = vmul.f32 %v2232, %v2460
    %v2479 = vmul.f32 %v2247, %v2460
    %v2480 = vmul.f32 %v2262, %v2460
    %v2481 = vmul.f32 %v2277, %v2460
    %v2482 = vmul.f32 %v2292, %v2460
    %v2483 = vmul.f32 %v2307, %v2460
    %v2484 = vmul.f32 %v2322, %v2460
    %v2485 = vmul.f32 %v2337, %v2460
    %v2486 = vmul.f32 %v2352, %v2460
    %v2487 = vmul.f32 %v2367, %v2460
    %v2488 = vmul.f32 %v2382, %v2460
    %v2489 = vmul.f32 %v2397, %v2460
    %v2490 = vmul.f32 %v2412, %v2460
    %v2491 = vmul.f32 %v2427, %v2460
    %v2492 = vmul.f32 %v2442, %v2460
    %v2493 = vmul.f32 %v2457, %v2460
    %v2494 = vsel %vm703, %v2462, 0.0
    %2495 = vadd.xlane.f32.xlu0 %v2494
    %v2496 = vpop.xlane.xlu0 %2495
    %v2497 = vsel %vm703, %v2463, 0.0
    %2498 = vadd.xlane.f32.xlu0 %v2497
    %v2499 = vpop.xlane.xlu0 %2498
    %v2500 = vsel %vm703, %v2464, 0.0
    %2501 = vadd.xlane.f32.xlu0 %v2500
    %v2502 = vpop.xlane.xlu0 %2501
    %v2503 = vsel %vm703, %v2465, 0.0
    %2504 = vadd.xlane.f32.xlu0 %v2503
    %v2505 = vpop.xlane.xlu0 %2504
    %v2506 = vsel %vm703, %v2466, 0.0
    %2507 = vadd.xlane.f32.xlu0 %v2506
    %v2508 = vpop.xlane.xlu0 %2507
    %v2509 = vsel %vm703, %v2467, 0.0
    %2510 = vadd.xlane.f32.xlu0 %v2509
    %v2511 = vpop.xlane.xlu0 %2510
    %v2512 = vsel %vm703, %v2468, 0.0
    %2513 = vadd.xlane.f32.xlu0 %v2512
    %v2514 = vpop.xlane.xlu0 %2513
    %v2515 = vsel %vm703, %v2469, 0.0
    %2516 = vadd.xlane.f32.xlu0 %v2515
    %v2517 = vpop.xlane.xlu0 %2516
    %v2518 = vsel %vm703, %v2470, 0.0
    %2519 = vadd.xlane.f32.xlu0 %v2518
    %v2520 = vpop.xlane.xlu0 %2519
    %v2521 = vsel %vm703, %v2471, 0.0
    %2522 = vadd.xlane.f32.xlu0 %v2521
    %v2523 = vpop.xlane.xlu0 %2522
    %v2524 = vsel %vm703, %v2472, 0.0
    %2525 = vadd.xlane.f32.xlu0 %v2524
    %v2526 = vpop.xlane.xlu0 %2525
    %v2527 = vsel %vm703, %v2473, 0.0
    %2528 = vadd.xlane.f32.xlu0 %v2527
    %v2529 = vpop.xlane.xlu0 %2528
    %v2530 = vsel %vm703, %v2474, 0.0
    %2531 = vadd.xlane.f32.xlu0 %v2530
    %v2532 = vpop.xlane.xlu0 %2531
    %v2533 = vsel %vm703, %v2475, 0.0
    %2534 = vadd.xlane.f32.xlu0 %v2533
    %v2535 = vpop.xlane.xlu0 %2534
    %v2536 = vsel %vm703, %v2476, 0.0
    %2537 = vadd.xlane.f32.xlu0 %v2536
    %v2538 = vpop.xlane.xlu0 %2537
    %v2539 = vsel %vm703, %v2477, 0.0
    %2540 = vadd.xlane.f32.xlu0 %v2539
    %v2541 = vpop.xlane.xlu0 %2540
    %v2542 = vsel %vm703, %v2478, 0.0
    %2543 = vadd.xlane.f32.xlu0 %v2542
    %v2544 = vpop.xlane.xlu0 %2543
    %v2545 = vsel %vm703, %v2479, 0.0
    %2546 = vadd.xlane.f32.xlu0 %v2545
    %v2547 = vpop.xlane.xlu0 %2546
    %v2548 = vsel %vm703, %v2480, 0.0
    %2549 = vadd.xlane.f32.xlu0 %v2548
    %v2550 = vpop.xlane.xlu0 %2549
    %v2551 = vsel %vm703, %v2481, 0.0
    %2552 = vadd.xlane.f32.xlu0 %v2551
    %v2553 = vpop.xlane.xlu0 %2552
    %v2554 = vsel %vm703, %v2482, 0.0
    %2555 = vadd.xlane.f32.xlu0 %v2554
    %v2556 = vpop.xlane.xlu0 %2555
    %v2557 = vsel %vm703, %v2483, 0.0
    %2558 = vadd.xlane.f32.xlu0 %v2557
    %v2559 = vpop.xlane.xlu0 %2558
    %v2560 = vsel %vm703, %v2484, 0.0
    %2561 = vadd.xlane.f32.xlu0 %v2560
    %v2562 = vpop.xlane.xlu0 %2561
    %v2563 = vsel %vm703, %v2485, 0.0
    %2564 = vadd.xlane.f32.xlu0 %v2563
    %v2565 = vpop.xlane.xlu0 %2564
    %v2566 = vsel %vm703, %v2486, 0.0
    %2567 = vadd.xlane.f32.xlu0 %v2566
    %v2568 = vpop.xlane.xlu0 %2567
    %v2569 = vsel %vm703, %v2487, 0.0
    %2570 = vadd.xlane.f32.xlu0 %v2569
    %v2571 = vpop.xlane.xlu0 %2570
    %v2572 = vsel %vm703, %v2488, 0.0
    %2573 = vadd.xlane.f32.xlu0 %v2572
    %v2574 = vpop.xlane.xlu0 %2573
    %v2575 = vsel %vm703, %v2489, 0.0
    %2576 = vadd.xlane.f32.xlu0 %v2575
    %v2577 = vpop.xlane.xlu0 %2576
    %v2578 = vsel %vm703, %v2490, 0.0
    %2579 = vadd.xlane.f32.xlu0 %v2578
    %v2580 = vpop.xlane.xlu0 %2579
    %v2581 = vsel %vm703, %v2491, 0.0
    %2582 = vadd.xlane.f32.xlu0 %v2581
    %v2583 = vpop.xlane.xlu0 %2582
    %v2584 = vsel %vm703, %v2492, 0.0
    %2585 = vadd.xlane.f32.xlu0 %v2584
    %v2586 = vpop.xlane.xlu0 %2585
    %v2587 = vsel %vm703, %v2493, 0.0
    %2588 = vadd.xlane.f32.xlu0 %v2587
    %v2589 = vpop.xlane.xlu0 %2588
    %v2590 = vld [vmem:[#allocation2] sm:$0x1]
    %v2592 = vperm.slane %v2590, 0
    %2593 = vset.pattern.permute.xlu0 0
    %2594 = vperm.xlu0 %2593, %v2592
    %v2595 = vpop.permute.xlu0 %2594
    %v2597 = vadd.f32 %v2496, %v2595
    %v2598 = vadd.f32 %v2499, %v2595
    %v2599 = vadd.f32 %v2502, %v2595
    %v2600 = vadd.f32 %v2505, %v2595
    %v2601 = vadd.f32 %v2508, %v2595
    %v2602 = vadd.f32 %v2511, %v2595
    %v2603 = vadd.f32 %v2514, %v2595
    %v2604 = vadd.f32 %v2517, %v2595
    %v2605 = vadd.f32 %v2520, %v2595
    %v2606 = vadd.f32 %v2523, %v2595
    %v2607 = vadd.f32 %v2526, %v2595
    %v2608 = vadd.f32 %v2529, %v2595
    %v2609 = vadd.f32 %v2532, %v2595
    %v2610 = vadd.f32 %v2535, %v2595
    %v2611 = vadd.f32 %v2538, %v2595
    %v2612 = vadd.f32 %v2541, %v2595
    %v2613 = vadd.f32 %v2544, %v2595
    %v2614 = vadd.f32 %v2547, %v2595
    %v2615 = vadd.f32 %v2550, %v2595
    %v2616 = vadd.f32 %v2553, %v2595
    %v2617 = vadd.f32 %v2556, %v2595
    %v2618 = vadd.f32 %v2559, %v2595
    %v2619 = vadd.f32 %v2562, %v2595
    %v2620 = vadd.f32 %v2565, %v2595
    %v2621 = vadd.f32 %v2568, %v2595
    %v2622 = vadd.f32 %v2571, %v2595
    %v2623 = vadd.f32 %v2574, %v2595
    %v2624 = vadd.f32 %v2577, %v2595
    %v2625 = vadd.f32 %v2580, %v2595
    %v2626 = vadd.f32 %v2583, %v2595
    %v2627 = vadd.f32 %v2586, %v2595
    %v2628 = vadd.f32 %v2589, %v2595
    %vm2629 = vcmp.gt.f32.partialorder %v91, 0.5
    %vm2630 = vcmp.gt.f32.partialorder %v92, 0.5
    %vm2631 = vcmp.gt.f32.partialorder %v93, 0.5
    %vm2632 = vcmp.gt.f32.partialorder %v94, 0.5
    %v2665 = vlaneseq
    %v2666 = vand.u32 %v2665, 127
    %v2667 = vperm.slane %v2597, %v2666
    %v2668 = vperm.slane %v2598, %v2666
    %v2669 = vperm.slane %v2599, %v2666
    %v2670 = vperm.slane %v2600, %v2666
    %v2671 = vperm.slane %v2601, %v2666
    %v2672 = vperm.slane %v2602, %v2666
    %v2673 = vperm.slane %v2603, %v2666
    %v2674 = vperm.slane %v2604, %v2666
    %v2675 = vperm.slane %v2605, %v2666
    %v2676 = vperm.slane %v2606, %v2666
    %v2677 = vperm.slane %v2607, %v2666
    %v2678 = vperm.slane %v2608, %v2666
    %v2679 = vperm.slane %v2609, %v2666
    %v2680 = vperm.slane %v2610, %v2666
    %v2681 = vperm.slane %v2611, %v2666
    %v2682 = vperm.slane %v2612, %v2666
    %v2683 = vperm.slane %v2613, %v2666
    %v2684 = vperm.slane %v2614, %v2666
    %v2685 = vperm.slane %v2615, %v2666
    %v2686 = vperm.slane %v2616, %v2666
    %v2687 = vperm.slane %v2617, %v2666
    %v2688 = vperm.slane %v2618, %v2666
    %v2689 = vperm.slane %v2619, %v2666
    %v2690 = vperm.slane %v2620, %v2666
    %v2691 = vperm.slane %v2621, %v2666
    %v2692 = vperm.slane %v2622, %v2666
    %v2693 = vperm.slane %v2623, %v2666
    %v2694 = vperm.slane %v2624, %v2666
    %v2695 = vperm.slane %v2625, %v2666
    %v2696 = vperm.slane %v2626, %v2666
    %v2697 = vperm.slane %v2627, %v2666
    %v2698 = vperm.slane %v2628, %v2666
    %v2699 = vsel %vm108, %v2668, %v2667
    %v2700 = vsel %vm112, %v2669, %v2699
    %v2701 = vsel %vm116, %v2670, %v2700
    %vm2702 = vcmask 1044484
    %v2703 = vsel %vm2702, %v2671, %v2701
    %vm2704 = vcmask 1045509
    %v2705 = vsel %vm2704, %v2672, %v2703
    %vm2706 = vcmask 1046534
    %v2707 = vsel %vm2706, %v2673, %v2705
    %vm2708 = vcmask 1047559
    %v2709 = vsel %vm2708, %v2674, %v2707
    %v2710 = vsel %vm108, %v2676, %v2675
    %v2711 = vsel %vm112, %v2677, %v2710
    %v2712 = vsel %vm116, %v2678, %v2711
    %v2713 = vsel %vm2702, %v2679, %v2712
    %v2714 = vsel %vm2704, %v2680, %v2713
    %v2715 = vsel %vm2706, %v2681, %v2714
    %v2716 = vsel %vm2708, %v2682, %v2715
    %v2717 = vsel %vm108, %v2684, %v2683
    %v2718 = vsel %vm112, %v2685, %v2717
    %v2719 = vsel %vm116, %v2686, %v2718
    %v2720 = vsel %vm2702, %v2687, %v2719
    %v2721 = vsel %vm2704, %v2688, %v2720
    %v2722 = vsel %vm2706, %v2689, %v2721
    %v2723 = vsel %vm2708, %v2690, %v2722
    %v2724 = vsel %vm108, %v2692, %v2691
    %v2725 = vsel %vm112, %v2693, %v2724
    %v2726 = vsel %vm116, %v2694, %v2725
    %v2727 = vsel %vm2702, %v2695, %v2726
    %v2728 = vsel %vm2704, %v2696, %v2727
    %v2729 = vsel %vm2706, %v2697, %v2728
    %v2730 = vsel %vm2708, %v2698, %v2729
    %v2735 = vsel %vm2629, %v2709, -2.1474836e+09
    %v2736 = vsel %vm2630, %v2716, -2.1474836e+09
    %v2737 = vsel %vm2631, %v2723, -2.1474836e+09
    %v2738 = vsel %vm2632, %v2730, -2.1474836e+09
    %vm2739 = vcmask 64512
    %v2740 = vsel %vm2739, %v2735, -inf
    %2741 = vmax.xlane.f32.xlu0 %v2740
    %v2742 = vpop.xlane.xlu0 %2741
    %v2743 = vsel %vm2739, %v2736, -inf
    %2744 = vmax.xlane.f32.xlu0 %v2743
    %v2745 = vpop.xlane.xlu0 %2744
    %v2746 = vsel %vm2739, %v2737, -inf
    %2747 = vmax.xlane.f32.xlu0 %v2746
    %v2748 = vpop.xlane.xlu0 %2747
    %v2749 = vsel %vm2739, %v2738, -inf
    %2750 = vmax.xlane.f32.xlu0 %v2749
    %v2751 = vpop.xlane.xlu0 %2750
    %v2752 = vsub.f32 %v2735, %v2742
    %v2753 = vsub.f32 %v2736, %v2745
    %v2754 = vsub.f32 %v2737, %v2748
    %v2755 = vsub.f32 %v2738, %v2751
    %v2756 = vmul.f32 %v2752, 1.442695
    %v2757 = vpow.pop %v2756
    %v2758 = vmul.f32 %v2753, 1.442695
    %v2759 = vpow.pop %v2758
    %v2760 = vmul.f32 %v2754, 1.442695
    %v2761 = vpow.pop %v2760
    %v2762 = vmul.f32 %v2755, 1.442695
    %v2763 = vpow.pop %v2762
    %v2764 = vsel %vm2739, %v2757, 0.0
    %2765 = vadd.xlane.f32.xlu0 %v2764
    %v2766 = vpop.xlane.xlu0 %2765
    %v2767 = vsel %vm2739, %v2759, 0.0
    %2768 = vadd.xlane.f32.xlu0 %v2767
    %v2769 = vpop.xlane.xlu0 %2768
    %v2770 = vsel %vm2739, %v2761, 0.0
    %2771 = vadd.xlane.f32.xlu0 %v2770
    %v2772 = vpop.xlane.xlu0 %2771
    %v2773 = vsel %vm2739, %v2763, 0.0
    %2774 = vadd.xlane.f32.xlu0 %v2773
    %v2775 = vpop.xlane.xlu0 %2774
    %v2776 = vrcp.pop %v2766
    %v2777 = vrcp.pop %v2769
    %v2778 = vrcp.pop %v2772
    %v2779 = vrcp.pop %v2775
    %v2780 = vmul.f32 %v2757, %v2776
    %v2781 = vmul.f32 %v2759, %v2777
    %v2782 = vmul.f32 %v2761, %v2778
    %v2783 = vmul.f32 %v2763, %v2779
    %v2784 = vmul.f32 %v2780, %v91
    %v2785 = vmul.f32 %v2781, %v92
    %v2786 = vmul.f32 %v2782, %v93
    %v2787 = vmul.f32 %v2783, %v94
    %v2788 = vperm.slane %v2784, 0
    %v2789 = vlaneseq
    %v2790 = vshrl.u32 %v2789, 7
    %2792 = vset.pattern.permute.xlu0 %v2790
    %2793 = vperm.xlu0 %2792, %v2788
    %v2794 = vpop.permute.xlu0 %2793
    %v2795 = vperm.slane %v2784, 1
    %v2796 = vlaneseq
    %v2797 = vshrl.u32 %v2796, 7
    %2799 = vset.pattern.permute.xlu0 %v2797
    %2800 = vperm.xlu0 %2799, %v2795
    %v2801 = vpop.permute.xlu0 %2800
    %v2802 = vperm.slane %v2784, 2
    %v2803 = vlaneseq
    %v2804 = vshrl.u32 %v2803, 7
    %2806 = vset.pattern.permute.xlu0 %v2804
    %2807 = vperm.xlu0 %2806, %v2802
    %v2808 = vpop.permute.xlu0 %2807
    %v2809 = vperm.slane %v2784, 3
    %v2810 = vlaneseq
    %v2811 = vshrl.u32 %v2810, 7
    %2813 = vset.pattern.permute.xlu0 %v2811
    %2814 = vperm.xlu0 %2813, %v2809
    %v2815 = vpop.permute.xlu0 %2814
    %v2816 = vperm.slane %v2784, 4
    %v2817 = vlaneseq
    %v2818 = vshrl.u32 %v2817, 7
    %2820 = vset.pattern.permute.xlu0 %v2818
    %2821 = vperm.xlu0 %2820, %v2816
    %v2822 = vpop.permute.xlu0 %2821
    %v2823 = vperm.slane %v2784, 5
    %v2824 = vlaneseq
    %v2825 = vshrl.u32 %v2824, 7
    %2827 = vset.pattern.permute.xlu0 %v2825
    %2828 = vperm.xlu0 %2827, %v2823
    %v2829 = vpop.permute.xlu0 %2828
    %v2830 = vperm.slane %v2784, 6
    %v2831 = vlaneseq
    %v2832 = vshrl.u32 %v2831, 7
    %2834 = vset.pattern.permute.xlu0 %v2832
    %2835 = vperm.xlu0 %2834, %v2830
    %v2836 = vpop.permute.xlu0 %2835
    %v2837 = vperm.slane %v2784, 7
    %v2838 = vlaneseq
    %v2839 = vshrl.u32 %v2838, 7
    %2841 = vset.pattern.permute.xlu0 %v2839
    %2842 = vperm.xlu0 %2841, %v2837
    %v2843 = vpop.permute.xlu0 %2842
    %v2844 = vperm.slane %v2785, 0
    %v2845 = vlaneseq
    %v2846 = vshrl.u32 %v2845, 7
    %2848 = vset.pattern.permute.xlu0 %v2846
    %2849 = vperm.xlu0 %2848, %v2844
    %v2850 = vpop.permute.xlu0 %2849
    %v2851 = vperm.slane %v2785, 1
    %v2852 = vlaneseq
    %v2853 = vshrl.u32 %v2852, 7
    %2855 = vset.pattern.permute.xlu0 %v2853
    %2856 = vperm.xlu0 %2855, %v2851
    %v2857 = vpop.permute.xlu0 %2856
    %v2858 = vperm.slane %v2785, 2
    %v2859 = vlaneseq
    %v2860 = vshrl.u32 %v2859, 7
    %2862 = vset.pattern.permute.xlu0 %v2860
    %2863 = vperm.xlu0 %2862, %v2858
    %v2864 = vpop.permute.xlu0 %2863
    %v2865 = vperm.slane %v2785, 3
    %v2866 = vlaneseq
    %v2867 = vshrl.u32 %v2866, 7
    %2869 = vset.pattern.permute.xlu0 %v2867
    %2870 = vperm.xlu0 %2869, %v2865
    %v2871 = vpop.permute.xlu0 %2870
    %v2872 = vperm.slane %v2785, 4
    %v2873 = vlaneseq
    %v2874 = vshrl.u32 %v2873, 7
    %2876 = vset.pattern.permute.xlu0 %v2874
    %2877 = vperm.xlu0 %2876, %v2872
    %v2878 = vpop.permute.xlu0 %2877
    %v2879 = vperm.slane %v2785, 5
    %v2880 = vlaneseq
    %v2881 = vshrl.u32 %v2880, 7
    %2883 = vset.pattern.permute.xlu0 %v2881
    %2884 = vperm.xlu0 %2883, %v2879
    %v2885 = vpop.permute.xlu0 %2884
    %v2886 = vperm.slane %v2785, 6
    %v2887 = vlaneseq
    %v2888 = vshrl.u32 %v2887, 7
    %2890 = vset.pattern.permute.xlu0 %v2888
    %2891 = vperm.xlu0 %2890, %v2886
    %v2892 = vpop.permute.xlu0 %2891
    %v2893 = vperm.slane %v2785, 7
    %v2894 = vlaneseq
    %v2895 = vshrl.u32 %v2894, 7
    %2897 = vset.pattern.permute.xlu0 %v2895
    %2898 = vperm.xlu0 %2897, %v2893
    %v2899 = vpop.permute.xlu0 %2898
    %v2900 = vperm.slane %v2786, 0
    %v2901 = vlaneseq
    %v2902 = vshrl.u32 %v2901, 7
    %2904 = vset.pattern.permute.xlu0 %v2902
    %2905 = vperm.xlu0 %2904, %v2900
    %v2906 = vpop.permute.xlu0 %2905
    %v2907 = vperm.slane %v2786, 1
    %v2908 = vlaneseq
    %v2909 = vshrl.u32 %v2908, 7
    %2911 = vset.pattern.permute.xlu0 %v2909
    %2912 = vperm.xlu0 %2911, %v2907
    %v2913 = vpop.permute.xlu0 %2912
    %v2914 = vperm.slane %v2786, 2
    %v2915 = vlaneseq
    %v2916 = vshrl.u32 %v2915, 7
    %2918 = vset.pattern.permute.xlu0 %v2916
    %2919 = vperm.xlu0 %2918, %v2914
    %v2920 = vpop.permute.xlu0 %2919
    %v2921 = vperm.slane %v2786, 3
    %v2922 = vlaneseq
    %v2923 = vshrl.u32 %v2922, 7
    %2925 = vset.pattern.permute.xlu0 %v2923
    %2926 = vperm.xlu0 %2925, %v2921
    %v2927 = vpop.permute.xlu0 %2926
    %v2928 = vperm.slane %v2786, 4
    %v2929 = vlaneseq
    %v2930 = vshrl.u32 %v2929, 7
    %2932 = vset.pattern.permute.xlu0 %v2930
    %2933 = vperm.xlu0 %2932, %v2928
    %v2934 = vpop.permute.xlu0 %2933
    %v2935 = vperm.slane %v2786, 5
    %v2936 = vlaneseq
    %v2937 = vshrl.u32 %v2936, 7
    %2939 = vset.pattern.permute.xlu0 %v2937
    %2940 = vperm.xlu0 %2939, %v2935
    %v2941 = vpop.permute.xlu0 %2940
    %v2942 = vperm.slane %v2786, 6
    %v2943 = vlaneseq
    %v2944 = vshrl.u32 %v2943, 7
    %2946 = vset.pattern.permute.xlu0 %v2944
    %2947 = vperm.xlu0 %2946, %v2942
    %v2948 = vpop.permute.xlu0 %2947
    %v2949 = vperm.slane %v2786, 7
    %v2950 = vlaneseq
    %v2951 = vshrl.u32 %v2950, 7
    %2953 = vset.pattern.permute.xlu0 %v2951
    %2954 = vperm.xlu0 %2953, %v2949
    %v2955 = vpop.permute.xlu0 %2954
    %v2956 = vperm.slane %v2787, 0
    %v2957 = vlaneseq
    %v2958 = vshrl.u32 %v2957, 7
    %2960 = vset.pattern.permute.xlu0 %v2958
    %2961 = vperm.xlu0 %2960, %v2956
    %v2962 = vpop.permute.xlu0 %2961
    %v2963 = vperm.slane %v2787, 1
    %v2964 = vlaneseq
    %v2965 = vshrl.u32 %v2964, 7
    %2967 = vset.pattern.permute.xlu0 %v2965
    %2968 = vperm.xlu0 %2967, %v2963
    %v2969 = vpop.permute.xlu0 %2968
    %v2970 = vperm.slane %v2787, 2
    %v2971 = vlaneseq
    %v2972 = vshrl.u32 %v2971, 7
    %2974 = vset.pattern.permute.xlu0 %v2972
    %2975 = vperm.xlu0 %2974, %v2970
    %v2976 = vpop.permute.xlu0 %2975
    %v2977 = vperm.slane %v2787, 3
    %v2978 = vlaneseq
    %v2979 = vshrl.u32 %v2978, 7
    %2981 = vset.pattern.permute.xlu0 %v2979
    %2982 = vperm.xlu0 %2981, %v2977
    %v2983 = vpop.permute.xlu0 %2982
    %v2984 = vperm.slane %v2787, 4
    %v2985 = vlaneseq
    %v2986 = vshrl.u32 %v2985, 7
    %2988 = vset.pattern.permute.xlu0 %v2986
    %2989 = vperm.xlu0 %2988, %v2984
    %v2990 = vpop.permute.xlu0 %2989
    %v2991 = vperm.slane %v2787, 5
    %v2992 = vlaneseq
    %v2993 = vshrl.u32 %v2992, 7
    %2995 = vset.pattern.permute.xlu0 %v2993
    %2996 = vperm.xlu0 %2995, %v2991
    %v2997 = vpop.permute.xlu0 %2996
    %v2998 = vperm.slane %v2787, 6
    %v2999 = vlaneseq
    %v3000 = vshrl.u32 %v2999, 7
    %3002 = vset.pattern.permute.xlu0 %v3000
    %3003 = vperm.xlu0 %3002, %v2998
    %v3004 = vpop.permute.xlu0 %3003
    %v3005 = vperm.slane %v2787, 7
    %v3006 = vlaneseq
    %v3007 = vshrl.u32 %v3006, 7
    %3009 = vset.pattern.permute.xlu0 %v3007
    %3010 = vperm.xlu0 %3009, %v3005
    %v3011 = vpop.permute.xlu0 %3010
    %v3012 = vmul.f32 %v2794, %v415
    %v3013 = vmul.f32 %v2801, %v416
    %v3014 = vmul.f32 %v2808, %v417
    %v3015 = vmul.f32 %v2815, %v418
    %v3016 = vmul.f32 %v2822, %v419
    %v3017 = vmul.f32 %v2829, %v420
    %v3018 = vmul.f32 %v2836, %v421
    %v3019 = vmul.f32 %v2843, %v422
    %v3020 = vmul.f32 %v2850, %v423
    %v3021 = vmul.f32 %v2857, %v424
    %v3022 = vmul.f32 %v2864, %v425
    %v3023 = vmul.f32 %v2871, %v426
    %v3024 = vmul.f32 %v2878, %v427
    %v3025 = vmul.f32 %v2885, %v428
    %v3026 = vmul.f32 %v2892, %v429
    %v3027 = vmul.f32 %v2899, %v430
    %v3028 = vmul.f32 %v2906, %v431
    %v3029 = vmul.f32 %v2913, %v432
    %v3030 = vmul.f32 %v2920, %v433
    %v3031 = vmul.f32 %v2927, %v434
    %v3032 = vmul.f32 %v2934, %v435
    %v3033 = vmul.f32 %v2941, %v436
    %v3034 = vmul.f32 %v2948, %v437
    %v3035 = vmul.f32 %v2955, %v438
    %v3036 = vmul.f32 %v2962, %v439
    %v3037 = vmul.f32 %v2969, %v440
    %v3038 = vmul.f32 %v2976, %v441
    %v3039 = vmul.f32 %v2983, %v442
    %v3040 = vmul.f32 %v2990, %v443
    %v3041 = vmul.f32 %v2997, %v444
    %v3042 = vmul.f32 %v3004, %v445
    %v3043 = vmul.f32 %v3011, %v446
    %v3044 = vsel %vm703, %v3012, 0.0
    %v3045 = vrot.slane %v3044, 4
    %v3046 = vadd.f32 %v3044, %v3045
    %v3047 = vrot.slane %v3046, 2
    %v3048 = vadd.f32 %v3046, %v3047
    %v3049 = vrot.slane %v3048, 1
    %v3050 = vadd.f32 %v3048, %v3049
    %v3051 = vsel %vm703, %v3013, 0.0
    %v3052 = vrot.slane %v3051, 4
    %v3053 = vadd.f32 %v3051, %v3052
    %v3054 = vrot.slane %v3053, 2
    %v3055 = vadd.f32 %v3053, %v3054
    %v3056 = vrot.slane %v3055, 1
    %v3057 = vadd.f32 %v3055, %v3056
    %v3058 = vsel %vm703, %v3014, 0.0
    %v3059 = vrot.slane %v3058, 4
    %v3060 = vadd.f32 %v3058, %v3059
    %v3061 = vrot.slane %v3060, 2
    %v3062 = vadd.f32 %v3060, %v3061
    %v3063 = vrot.slane %v3062, 1
    %v3064 = vadd.f32 %v3062, %v3063
    %v3065 = vsel %vm703, %v3015, 0.0
    %v3066 = vrot.slane %v3065, 4
    %v3067 = vadd.f32 %v3065, %v3066
    %v3068 = vrot.slane %v3067, 2
    %v3069 = vadd.f32 %v3067, %v3068
    %v3070 = vrot.slane %v3069, 1
    %v3071 = vadd.f32 %v3069, %v3070
    %v3072 = vsel %vm703, %v3016, 0.0
    %v3073 = vrot.slane %v3072, 4
    %v3074 = vadd.f32 %v3072, %v3073
    %v3075 = vrot.slane %v3074, 2
    %v3076 = vadd.f32 %v3074, %v3075
    %v3077 = vrot.slane %v3076, 1
    %v3078 = vadd.f32 %v3076, %v3077
    %v3079 = vsel %vm703, %v3017, 0.0
    %v3080 = vrot.slane %v3079, 4
    %v3081 = vadd.f32 %v3079, %v3080
    %v3082 = vrot.slane %v3081, 2
    %v3083 = vadd.f32 %v3081, %v3082
    %v3084 = vrot.slane %v3083, 1
    %v3085 = vadd.f32 %v3083, %v3084
    %v3086 = vsel %vm703, %v3018, 0.0
    %v3087 = vrot.slane %v3086, 4
    %v3088 = vadd.f32 %v3086, %v3087
    %v3089 = vrot.slane %v3088, 2
    %v3090 = vadd.f32 %v3088, %v3089
    %v3091 = vrot.slane %v3090, 1
    %v3092 = vadd.f32 %v3090, %v3091
    %v3093 = vsel %vm703, %v3019, 0.0
    %v3094 = vrot.slane %v3093, 4
    %v3095 = vadd.f32 %v3093, %v3094
    %v3096 = vrot.slane %v3095, 2
    %v3097 = vadd.f32 %v3095, %v3096
    %v3098 = vrot.slane %v3097, 1
    %v3099 = vadd.f32 %v3097, %v3098
    %v3100 = vsel %vm703, %v3020, 0.0
    %v3101 = vrot.slane %v3100, 4
    %v3102 = vadd.f32 %v3100, %v3101
    %v3103 = vrot.slane %v3102, 2
    %v3104 = vadd.f32 %v3102, %v3103
    %v3105 = vrot.slane %v3104, 1
    %v3106 = vadd.f32 %v3104, %v3105
    %v3107 = vsel %vm703, %v3021, 0.0
    %v3108 = vrot.slane %v3107, 4
    %v3109 = vadd.f32 %v3107, %v3108
    %v3110 = vrot.slane %v3109, 2
    %v3111 = vadd.f32 %v3109, %v3110
    %v3112 = vrot.slane %v3111, 1
    %v3113 = vadd.f32 %v3111, %v3112
    %v3114 = vsel %vm703, %v3022, 0.0
    %v3115 = vrot.slane %v3114, 4
    %v3116 = vadd.f32 %v3114, %v3115
    %v3117 = vrot.slane %v3116, 2
    %v3118 = vadd.f32 %v3116, %v3117
    %v3119 = vrot.slane %v3118, 1
    %v3120 = vadd.f32 %v3118, %v3119
    %v3121 = vsel %vm703, %v3023, 0.0
    %v3122 = vrot.slane %v3121, 4
    %v3123 = vadd.f32 %v3121, %v3122
    %v3124 = vrot.slane %v3123, 2
    %v3125 = vadd.f32 %v3123, %v3124
    %v3126 = vrot.slane %v3125, 1
    %v3127 = vadd.f32 %v3125, %v3126
    %v3128 = vsel %vm703, %v3024, 0.0
    %v3129 = vrot.slane %v3128, 4
    %v3130 = vadd.f32 %v3128, %v3129
    %v3131 = vrot.slane %v3130, 2
    %v3132 = vadd.f32 %v3130, %v3131
    %v3133 = vrot.slane %v3132, 1
    %v3134 = vadd.f32 %v3132, %v3133
    %v3135 = vsel %vm703, %v3025, 0.0
    %v3136 = vrot.slane %v3135, 4
    %v3137 = vadd.f32 %v3135, %v3136
    %v3138 = vrot.slane %v3137, 2
    %v3139 = vadd.f32 %v3137, %v3138
    %v3140 = vrot.slane %v3139, 1
    %v3141 = vadd.f32 %v3139, %v3140
    %v3142 = vsel %vm703, %v3026, 0.0
    %v3143 = vrot.slane %v3142, 4
    %v3144 = vadd.f32 %v3142, %v3143
    %v3145 = vrot.slane %v3144, 2
    %v3146 = vadd.f32 %v3144, %v3145
    %v3147 = vrot.slane %v3146, 1
    %v3148 = vadd.f32 %v3146, %v3147
    %v3149 = vsel %vm703, %v3027, 0.0
    %v3150 = vrot.slane %v3149, 4
    %v3151 = vadd.f32 %v3149, %v3150
    %v3152 = vrot.slane %v3151, 2
    %v3153 = vadd.f32 %v3151, %v3152
    %v3154 = vrot.slane %v3153, 1
    %v3155 = vadd.f32 %v3153, %v3154
    %v3156 = vsel %vm703, %v3028, 0.0
    %v3157 = vrot.slane %v3156, 4
    %v3158 = vadd.f32 %v3156, %v3157
    %v3159 = vrot.slane %v3158, 2
    %v3160 = vadd.f32 %v3158, %v3159
    %v3161 = vrot.slane %v3160, 1
    %v3162 = vadd.f32 %v3160, %v3161
    %v3163 = vsel %vm703, %v3029, 0.0
    %v3164 = vrot.slane %v3163, 4
    %v3165 = vadd.f32 %v3163, %v3164
    %v3166 = vrot.slane %v3165, 2
    %v3167 = vadd.f32 %v3165, %v3166
    %v3168 = vrot.slane %v3167, 1
    %v3169 = vadd.f32 %v3167, %v3168
    %v3170 = vsel %vm703, %v3030, 0.0
    %v3171 = vrot.slane %v3170, 4
    %v3172 = vadd.f32 %v3170, %v3171
    %v3173 = vrot.slane %v3172, 2
    %v3174 = vadd.f32 %v3172, %v3173
    %v3175 = vrot.slane %v3174, 1
    %v3176 = vadd.f32 %v3174, %v3175
    %v3177 = vsel %vm703, %v3031, 0.0
    %v3178 = vrot.slane %v3177, 4
    %v3179 = vadd.f32 %v3177, %v3178
    %v3180 = vrot.slane %v3179, 2
    %v3181 = vadd.f32 %v3179, %v3180
    %v3182 = vrot.slane %v3181, 1
    %v3183 = vadd.f32 %v3181, %v3182
    %v3184 = vsel %vm703, %v3032, 0.0
    %v3185 = vrot.slane %v3184, 4
    %v3186 = vadd.f32 %v3184, %v3185
    %v3187 = vrot.slane %v3186, 2
    %v3188 = vadd.f32 %v3186, %v3187
    %v3189 = vrot.slane %v3188, 1
    %v3190 = vadd.f32 %v3188, %v3189
    %v3191 = vsel %vm703, %v3033, 0.0
    %v3192 = vrot.slane %v3191, 4
    %v3193 = vadd.f32 %v3191, %v3192
    %v3194 = vrot.slane %v3193, 2
    %v3195 = vadd.f32 %v3193, %v3194
    %v3196 = vrot.slane %v3195, 1
    %v3197 = vadd.f32 %v3195, %v3196
    %v3198 = vsel %vm703, %v3034, 0.0
    %v3199 = vrot.slane %v3198, 4
    %v3200 = vadd.f32 %v3198, %v3199
    %v3201 = vrot.slane %v3200, 2
    %v3202 = vadd.f32 %v3200, %v3201
    %v3203 = vrot.slane %v3202, 1
    %v3204 = vadd.f32 %v3202, %v3203
    %v3205 = vsel %vm703, %v3035, 0.0
    %v3206 = vrot.slane %v3205, 4
    %v3207 = vadd.f32 %v3205, %v3206
    %v3208 = vrot.slane %v3207, 2
    %v3209 = vadd.f32 %v3207, %v3208
    %v3210 = vrot.slane %v3209, 1
    %v3211 = vadd.f32 %v3209, %v3210
    %v3212 = vsel %vm703, %v3036, 0.0
    %v3213 = vrot.slane %v3212, 4
    %v3214 = vadd.f32 %v3212, %v3213
    %v3215 = vrot.slane %v3214, 2
    %v3216 = vadd.f32 %v3214, %v3215
    %v3217 = vrot.slane %v3216, 1
    %v3218 = vadd.f32 %v3216, %v3217
    %v3219 = vsel %vm703, %v3037, 0.0
    %v3220 = vrot.slane %v3219, 4
    %v3221 = vadd.f32 %v3219, %v3220
    %v3222 = vrot.slane %v3221, 2
    %v3223 = vadd.f32 %v3221, %v3222
    %v3224 = vrot.slane %v3223, 1
    %v3225 = vadd.f32 %v3223, %v3224
    %v3226 = vsel %vm703, %v3038, 0.0
    %v3227 = vrot.slane %v3226, 4
    %v3228 = vadd.f32 %v3226, %v3227
    %v3229 = vrot.slane %v3228, 2
    %v3230 = vadd.f32 %v3228, %v3229
    %v3231 = vrot.slane %v3230, 1
    %v3232 = vadd.f32 %v3230, %v3231
    %v3233 = vsel %vm703, %v3039, 0.0
    %v3234 = vrot.slane %v3233, 4
    %v3235 = vadd.f32 %v3233, %v3234
    %v3236 = vrot.slane %v3235, 2
    %v3237 = vadd.f32 %v3235, %v3236
    %v3238 = vrot.slane %v3237, 1
    %v3239 = vadd.f32 %v3237, %v3238
    %v3240 = vsel %vm703, %v3040, 0.0
    %v3241 = vrot.slane %v3240, 4
    %v3242 = vadd.f32 %v3240, %v3241
    %v3243 = vrot.slane %v3242, 2
    %v3244 = vadd.f32 %v3242, %v3243
    %v3245 = vrot.slane %v3244, 1
    %v3246 = vadd.f32 %v3244, %v3245
    %v3247 = vsel %vm703, %v3041, 0.0
    %v3248 = vrot.slane %v3247, 4
    %v3249 = vadd.f32 %v3247, %v3248
    %v3250 = vrot.slane %v3249, 2
    %v3251 = vadd.f32 %v3249, %v3250
    %v3252 = vrot.slane %v3251, 1
    %v3253 = vadd.f32 %v3251, %v3252
    %v3254 = vsel %vm703, %v3042, 0.0
    %v3255 = vrot.slane %v3254, 4
    %v3256 = vadd.f32 %v3254, %v3255
    %v3257 = vrot.slane %v3256, 2
    %v3258 = vadd.f32 %v3256, %v3257
    %v3259 = vrot.slane %v3258, 1
    %v3260 = vadd.f32 %v3258, %v3259
    %v3261 = vsel %vm703, %v3043, 0.0
    %v3262 = vrot.slane %v3261, 4
    %v3263 = vadd.f32 %v3261, %v3262
    %v3264 = vrot.slane %v3263, 2
    %v3265 = vadd.f32 %v3263, %v3264
    %v3266 = vrot.slane %v3265, 1
    %v3267 = vadd.f32 %v3265, %v3266
    %v3300 = vsel %vm108, %v3057, %v3050
    %v3301 = vsel %vm112, %v3064, %v3300
    %v3302 = vsel %vm116, %v3071, %v3301
    %v3303 = vsel %vm2702, %v3078, %v3302
    %v3304 = vsel %vm2704, %v3085, %v3303
    %v3305 = vsel %vm2706, %v3092, %v3304
    %v3306 = vsel %vm2708, %v3099, %v3305
    %v3307 = vsel %vm108, %v3113, %v3106
    %v3308 = vsel %vm112, %v3120, %v3307
    %v3309 = vsel %vm116, %v3127, %v3308
    %v3310 = vsel %vm2702, %v3134, %v3309
    %v3311 = vsel %vm2704, %v3141, %v3310
    %v3312 = vsel %vm2706, %v3148, %v3311
    %v3313 = vsel %vm2708, %v3155, %v3312
    %v3314 = vsel %vm108, %v3169, %v3162
    %v3315 = vsel %vm112, %v3176, %v3314
    %v3316 = vsel %vm116, %v3183, %v3315
    %v3317 = vsel %vm2702, %v3190, %v3316
    %v3318 = vsel %vm2704, %v3197, %v3317
    %v3319 = vsel %vm2706, %v3204, %v3318
    %v3320 = vsel %vm2708, %v3211, %v3319
    %v3321 = vsel %vm108, %v3225, %v3218
    %v3322 = vsel %vm112, %v3232, %v3321
    %v3323 = vsel %vm116, %v3239, %v3322
    %v3324 = vsel %vm2702, %v3246, %v3323
    %v3325 = vsel %vm2704, %v3253, %v3324
    %v3326 = vsel %vm2706, %v3260, %v3325
    %v3327 = vsel %vm2708, %v3267, %v3326
    %3332 = vst.msk [vmem:[#allocation6] sm:$0xff] %vm703, %v3306
    %3333 = vst.msk [vmem:[#allocation6 + $0x8] sm:$0xff] %vm703, %v3313
    %3334 = vst.msk [vmem:[#allocation6 + $0x10] sm:$0xff] %vm703, %v3320
    %3335 = vst.msk [vmem:[#allocation6 + $0x18] sm:$0xff] %vm703, %v3327
    // Predicated region
    $region46: #{tpu_custom_call.1} parent=1 // pred_check
      _
    $region47: #{tpu_custom_call.1} parent=1 // pred_check_branch
      %3337 = sbr.rel (0) target = $region49
    $region48: #{tpu_custom_call.1} parent=1 // pred_region
      %3339 = vsyncadd [#allocation5], 0
      %s3340 = sshll.u32 [#allocation6], 4
      %s3341 = int_to_ptr.vmem [resolvable:$true] %s3340
      %s3342 = sshll.u32 %s10, 4
      %s3343 = int_to_ptr.hbm [resolvable:$true] %s3342
      %3348 = dma.vmem_to_hbm [thread:$0]  %s3341, 512, %s3343, [#allocation5], 128, 128, 8
    $region49: #{tpu_custom_call.1} parent=1 // pred_fallthru
      _
    // Predicated region
    $region50: #{tpu_custom_call.1} parent=1 // pred_check
      _
    $region51: #{tpu_custom_call.1} parent=1 // pred_check_branch
      %3350 = sbr.rel (0) target = $region53
    $region52: #{tpu_custom_call.1} parent=1 // pred_region
      %3352 = dma.done [#allocation5], 512
    $region53: #{tpu_custom_call.1} parent=1 // pred_fallthru
      _
    %3353 = vsyncpa [#allocation4], 1
    %3354 = vsyncpa [#allocation5], 1

</llo_original>
